<compile_context>
chip_gen: v6e
topology: v6e:2x2x1
jax: 0.10.0
libtpu: 0.0.40
codegen_flags: <defaults>
</compile_context>

<pallas_src>
import math

import jax
import jax.numpy as jnp
from jax.experimental import pallas as pl
from jax.experimental.pallas import tpu as pltpu

# ------------------------------------------------------------- config ------
VOCAB = 100
MAX_POS = 16
H = 32                # real hidden size
NH = 4                # attention heads
HD = H // NH          # real head dim (8)
F = 64                # real FFN intermediate size
N_LAYERS_TEACHER = 2
N_LAYERS_STUDENT = 1
NUM_CLASSES = 4
LN_EPS = 1e-12

# Padded (lane-dense) sizes used inside the kernel.
HP = 128              # hidden padded to a full lane group
SLAB = 128            # every weight slab is (HP, SLAB)
CP = 128              # classifier classes padded
LMAX = max(N_LAYERS_TEACHER, N_LAYERS_STUDENT)
N_MODELS = 2          # grid axis 0: 0 = teacher, 1 = student

# Per-layer stacked weight slabs (order within the (N_WSLABS, HP, SLAB) block).
W_Q, W_K, W_V, W_O, W_1, W_2 = range(6)
N_WSLABS = 6

# Per-layer packed bias / LayerNorm rows (NVEC rows of HP lanes).
(ROW_BQ, ROW_BK, ROW_BV, ROW_BO,
 ROW_G1, ROW_BE1, ROW_B1, ROW_B2, ROW_G2, ROW_BE2) = range(10)
NVEC = 16             # padded row count (multiple of 8)

# Per-model vector rows: 0 = emb LN gamma, 1 = emb LN beta, 2 = classifier bias.
MROWS = 8


# ---------------------------------------------------------- kernel body ----
def _full_mask():
    lane = jax.lax.broadcasted_iota(jnp.int32, (1, HP), 1)
    return (lane < H).astype(jnp.float32)


def _head_mask(h):
    lane = jax.lax.broadcasted_iota(jnp.int32, (1, HP), 1)
    return ((lane >= h * HD) & (lane < (h + 1) * HD)).astype(jnp.float32)


def _masked_layernorm(x, gamma, beta, fmask):
    # LayerNorm over the first H (real) lanes only; padded lanes stay zero
    # because gamma/beta are zero-padded and cent is masked.
    mean = jnp.sum(x * fmask, axis=-1, keepdims=True) * (1.0 / H)
    cent = (x - mean) * fmask
    var = jnp.sum(cent * cent, axis=-1, keepdims=True) * (1.0 / H)
    return cent * jax.lax.rsqrt(var + LN_EPS) * gamma + beta


def _gelu_tanh(x):
    # TODO(synk): HF BERT/DistilBERT use exact erf GELU; tanh approximation here.
    c = math.sqrt(2.0 / math.pi)
    return 0.5 * x * (1.0 + jnp.tanh(c * (x + 0.044715 * x * x * x)))


def fused_encoder_kernel(emb_ref, bias_ref, mvec_ref, w_ref, lvec_ref,
                         clsw_ref, out_ref, x_ref):
    """grid = (model, layer).  Per step: (layer 0 only) embedding LayerNorm
    into the persistent activation scratch, then one encoder layer (skipped
    entirely for the student's padded layer), then (last layer step only) the
    classifier on every position."""
    m = pl.program_id(0)
    l = pl.program_id(1)
    n_layers = jnp.where(m == 0, N_LAYERS_TEACHER, N_LAYERS_STUDENT)
    fmask = _full_mask()
    bs = x_ref.shape[0]

    # ---- first layer step: embedding LayerNorm -> activation scratch ------
    @pl.when(l == 0)
    def _():
        x_ref[...] = _masked_layernorm(emb_ref[...], mvec_ref[0:1, :],
                                       mvec_ref[1:2, :], fmask)

    # ---- encoder layer l (skipped for the student's padded layer) ---------
    @pl.when(l < n_layers)
    def _():
        x = x_ref[...]
        xb = x.astype(jnp.bfloat16)     # bf16 operand for the weight matmuls

        def row(r):                     # static row -> (1, HP) f32 bias/LN vec
            return lvec_ref[r:r + 1, :]

        def wdot(v, slab):              # bf16 x bf16 -> f32 accumulation
            return jnp.dot(v, w_ref[slab], preferred_element_type=jnp.float32)

        # Single-slab projections; all heads live at lanes 0:H (head h at
        # lanes h*HD:(h+1)*HD in q, k and v alike).  Score scale is already
        # folded into W_Q / b_q.
        q = wdot(xb, W_Q) + row(ROW_BQ)
        k = wdot(xb, W_K) + row(ROW_BK)
        v = wdot(xb, W_V) + row(ROW_BV)

        masks = [_head_mask(h) for h in range(NH)]
        # Stack the per-head masked queries so the score contraction (one
        # internal transpose of k) and the softmax reductions run once per
        # layer for all heads.
        q_stack = jnp.concatenate([q * mh for mh in masks], axis=0)  # (NH*bs,HP)
        s = jax.lax.dot_general(q_stack, k, (((1,), (1,)), ((), ())),
                                preferred_element_type=jnp.float32)  # (NH*bs,bs)
        s = s + bias_ref[...]            # block-diag + key-padding bias (tiled)
        s = s - jnp.max(s, axis=-1, keepdims=True)
        e = jnp.exp(s)
        p = e * pl.reciprocal(jnp.sum(e, axis=-1, keepdims=True), approx=True)

        # Per-head context lands at its own lane range -> heads "concatenate"
        # by summation; no lane shuffles needed.
        ctx = jnp.zeros_like(x)
        for h in range(NH):
            ph = p[h * bs:(h + 1) * bs, :]                       # (bs, bs)
            ctx = ctx + jnp.dot(ph, v * masks[h],
                                preferred_element_type=jnp.float32)
        attn = wdot(ctx.astype(jnp.bfloat16), W_O) + row(ROW_BO)

        h1 = _masked_layernorm(x + attn, row(ROW_G1), row(ROW_BE1), fmask)
        ff = _gelu_tanh(wdot(h1.astype(jnp.bfloat16), W_1) + row(ROW_B1))
        ff = wdot(ff.astype(jnp.bfloat16), W_2) + row(ROW_B2)
        x_ref[...] = _masked_layernorm(h1 + ff, row(ROW_G2), row(ROW_BE2),
                                       fmask)

    # ---- last layer step: classifier on every position (CLS sliced outside)
    @pl.when(l == LMAX - 1)
    def _():
        out_ref[...] = (jnp.dot(x_ref[...].astype(jnp.bfloat16), clsw_ref[...],
                                preferred_element_type=jnp.float32)
                        + mvec_ref[2:3, :])


# ------------------------------------------------------- pallas wrapper ----
def fused_forward(emb, attn_bias_stacked, packed):
    bs = emb.shape[1]
    in_specs = [
        pl.BlockSpec((None, bs, HP), lambda m, l: (m, 0, 0)),          # emb
        pl.BlockSpec((NH * bs, bs), lambda m, l: (0, 0)),              # mask bias
        pl.BlockSpec((None, MROWS, HP), lambda m, l: (m, 0, 0)),       # emb LN / cls b
        pl.BlockSpec((None, None, N_WSLABS, HP, SLAB),
                     lambda m, l: (m, l, 0, 0, 0)),                    # layer weights
        pl.BlockSpec((None, None, NVEC, HP), lambda m, l: (m, l, 0, 0)),  # layer vecs
        pl.BlockSpec((None, HP, CP), lambda m, l: (m, 0, 0)),          # cls W
    ]
    return pl.pallas_call(
        fused_encoder_kernel,
        out_shape=jax.ShapeDtypeStruct((N_MODELS, bs, CP), jnp.float32),
        grid=(N_MODELS, LMAX),
        in_specs=in_specs,
        out_specs=pl.BlockSpec((None, bs, CP), lambda m, l: (m, 0, 0)),
        scratch_shapes=[pltpu.VMEM((bs, HP), jnp.float32)],   # persistent x
        compiler_params=pltpu.CompilerParams(
            dimension_semantics=("parallel", "arbitrary")),   # v7x: 2 models on 2 TCs
    )(emb, attn_bias_stacked, packed["mvec"], packed["w"], packed["lvec"],
      packed["cls_w"])


# --------------------------------------------------------------- params ----
def _init_layer(key):
    ks = jax.random.split(key, 6)
    n = lambda k, s: (0.02 * jax.random.normal(k, s)).astype(jnp.float32)
    z = lambda s: jnp.zeros(s, jnp.float32)
    o = lambda s: jnp.ones(s, jnp.float32)
    return dict(
        wq=n(ks[0], (H, H)), bq=z((H,)),
        wk=n(ks[1], (H, H)), bk=z((H,)),
        wv=n(ks[2], (H, H)), bv=z((H,)),
        wo=n(ks[3], (H, H)), bo=z((H,)),
        g1=o((H,)), be1=z((H,)),
        w1=n(ks[4], (H, F)), b1=z((F,)),
        w2=n(ks[5], (F, H)), b2=z((H,)),
        g2=o((H,)), be2=z((H,)),
    )


def _init_encoder(key, num_layers, with_token_type):
    ks = jax.random.split(key, num_layers + 3)
    n = lambda k, s: (0.02 * jax.random.normal(k, s)).astype(jnp.float32)
    p = dict(
        word_emb=n(ks[0], (VOCAB, H)),
        pos_emb=n(ks[1], (MAX_POS, H)),
        emb_ln_g=jnp.ones((H,), jnp.float32),
        emb_ln_b=jnp.zeros((H,), jnp.float32),
        layers=[_init_layer(ks[3 + i]) for i in range(num_layers)],
    )
    if with_token_type:
        p["type_emb"] = n(ks[2], (2, H))
    return p


def init_params(key):
    kt, ksd, ktc, ksc = jax.random.split(key, 4)
    n = lambda k, s: (0.02 * jax.random.normal(k, s)).astype(jnp.float32)
    return dict(
        teacher=_init_encoder(kt, N_LAYERS_TEACHER, with_token_type=True),
        student=_init_encoder(ksd, N_LAYERS_STUDENT, with_token_type=False),
        teacher_cls_w=n(ktc, (H, NUM_CLASSES)),
        teacher_cls_b=jnp.zeros((NUM_CLASSES,), jnp.float32),
        student_cls_w=n(ksc, (H, NUM_CLASSES)),
        student_cls_b=jnp.zeros((NUM_CLASSES,), jnp.float32),
    )


# --------------------------------------------- pack params (pad + stack) ---
def _pad2(a, rows, cols):
    r, c = a.shape
    return jnp.zeros((rows, cols), jnp.float32).at[:r, :c].set(
        a.astype(jnp.float32))


def _padrow(a, cols):
    return jnp.zeros((cols,), jnp.float32).at[:a.shape[0]].set(
        a.astype(jnp.float32))


def _pack_layer(lp):
    scale = 1.0 / math.sqrt(HD)         # folded into W_Q / b_q
    w = jnp.stack([
        _pad2(lp["wq"] * scale, HP, SLAB),   # W_Q
        _pad2(lp["wk"], HP, SLAB),           # W_K
        _pad2(lp["wv"], HP, SLAB),           # W_V
        _pad2(lp["wo"], HP, SLAB),           # W_O
        _pad2(lp["w1"], HP, SLAB),           # W_1 (H,F)
        _pad2(lp["w2"], HP, SLAB),           # W_2 (F,H)
    ])                                       # (N_WSLABS, HP, SLAB)
    vec = jnp.zeros((NVEC, HP), jnp.float32)
    vec = vec.at[ROW_BQ, :H].set(lp["bq"] * scale)
    vec = vec.at[ROW_BK, :H].set(lp["bk"])
    vec = vec.at[ROW_BV, :H].set(lp["bv"])
    vec = vec.at[ROW_BO, :H].set(lp["bo"])
    vec = vec.at[ROW_G1, :H].set(lp["g1"])
    vec = vec.at[ROW_BE1, :H].set(lp["be1"])
    vec = vec.at[ROW_B1, :F].set(lp["b1"])
    vec = vec.at[ROW_B2, :H].set(lp["b2"])
    vec = vec.at[ROW_G2, :H].set(lp["g2"])
    vec = vec.at[ROW_BE2, :H].set(lp["be2"])
    return w, vec


def _pack_encoder(ep):
    ws, vecs = [], []
    for lp in ep["layers"]:
        w, vec = _pack_layer(lp)
        ws.append(w)
        vecs.append(vec)
    while len(ws) < LMAX:     # padded layers; skipped (not computed) in-kernel
        ws.append(jnp.zeros((N_WSLABS, HP, SLAB), jnp.float32))
        vecs.append(jnp.zeros((NVEC, HP), jnp.float32))
    return dict(
        w=jnp.stack(ws),             # (LMAX, N_WSLABS, HP, SLAB)
        lvec=jnp.stack(vecs),        # (LMAX, NVEC, HP)
        word=_pad2(ep["word_emb"], VOCAB, HP),
        pos=_pad2(ep["pos_emb"], MAX_POS, HP),
        emb_ln_g=_padrow(ep["emb_ln_g"], HP),
        emb_ln_b=_padrow(ep["emb_ln_b"], HP),
    )


def pack_params(params):
    t = _pack_encoder(params["teacher"])
    s = _pack_encoder(params["student"])
    mvec = jnp.zeros((N_MODELS, MROWS, HP), jnp.float32)
    mvec = mvec.at[0, 0].set(t["emb_ln_g"]).at[0, 1].set(t["emb_ln_b"])
    mvec = mvec.at[1, 0].set(s["emb_ln_g"]).at[1, 1].set(s["emb_ln_b"])
    mvec = mvec.at[0, 2].set(_padrow(params["teacher_cls_b"], CP))
    mvec = mvec.at[1, 2].set(_padrow(params["student_cls_b"], CP))
    return dict(
        # bf16 weight slabs: halves DMA bytes / VMEM; f32 accumulation at dots.
        w=jnp.stack([t["w"], s["w"]]).astype(jnp.bfloat16),  # (2,LMAX,6,HP,SLAB)
        lvec=jnp.stack([t["lvec"], s["lvec"]]),              # (2,LMAX,NVEC,HP) f32
        mvec=mvec,                                           # (2,MROWS,HP) f32
        cls_w=jnp.stack([_pad2(params["teacher_cls_w"], HP, CP),
                         _pad2(params["student_cls_w"], HP, CP)]
                        ).astype(jnp.bfloat16),              # (2,HP,CP)
        t_word=t["word"], t_pos=t["pos"],
        t_type=_pad2(params["teacher"]["type_emb"], 2, HP),
        s_word=s["word"], s_pos=s["pos"],
    )


# -------------------------------------------------------------- forward ----
def distilbert_student_forward(packed, input_ids, attention_mask):
    B, S = input_ids.shape
    bs = B * S
    # Embedding gathers (plain-JAX glue); tables are already lane-padded.
    t_emb = (packed["t_word"][input_ids] + packed["t_pos"][:S][None, :, :]
             + packed["t_type"][0][None, None, :]).reshape(bs, HP)
    s_emb = (packed["s_word"][input_ids]
             + packed["s_pos"][:S][None, :, :]).reshape(bs, HP)
    emb = jnp.stack([t_emb, s_emb]).astype(jnp.float32)       # (2, B*S, HP)

    # Block-diagonal additive attention bias: same-sample AND unmasked key,
    # pre-tiled for the NH stacked heads used inside the kernel.
    tok_b = jnp.repeat(jnp.arange(B), S)
    key_ok = attention_mask.reshape(-1) > 0
    allowed = (tok_b[:, None] == tok_b[None, :]) & key_ok[None, :]
    attn_bias = jnp.where(allowed, 0.0, -1e9).astype(jnp.float32)  # (bs, bs)
    attn_bias_stacked = jnp.tile(attn_bias, (NH, 1))               # (NH*bs, bs)

    logits_all = fused_forward(emb, attn_bias_stacked, packed)     # (2, bs, CP)
    cls = logits_all.reshape(N_MODELS, B, S, CP)[:, :, 0, :NUM_CLASSES]
    teacher_logits = jax.lax.stop_gradient(cls[0])   # frozen teacher (no_grad)
    student_logits = cls[1]
    return student_logits, teacher_logits


# ------------------------------------------------------------------ main ---
if __name__ == "__main__":
    key = jax.random.PRNGKey(0)
    kp, kids = jax.random.split(key)
    params = init_params(kp)
    packed = pack_params(params)

    B, S = 2, 8
    input_ids = jax.random.randint(kids, (B, S), 0, VOCAB, dtype=jnp.int32)
    attention_mask = jnp.array(
        [[1, 1, 1, 1, 1, 1, 1, 1],
         [1, 1, 1, 1, 1, 0, 0, 0]], dtype=jnp.int32)

    fwd = jax.jit(distilbert_student_forward)
    student_logits, teacher_logits = fwd(packed, input_ids, attention_mask)
    jax.block_until_ready((student_logits, teacher_logits))

    assert student_logits.shape == (B, NUM_CLASSES)
    assert teacher_logits.shape == (B, NUM_CLASSES)
    assert bool(jnp.all(jnp.isfinite(student_logits)))
    assert bool(jnp.all(jnp.isfinite(teacher_logits)))
    print("KERNEL_OK")
</pallas_src>

<mosaic_0001>
module attributes {stable_mosaic.version = 11 : i64} {
  func.func @fused_encoder_kernel(%arg0: i32, %arg1: i32, %arg2: memref<1x16x128xf32, #tpu.memory_space<vmem>>, %arg3: memref<64x16xf32, #tpu.memory_space<vmem>>, %arg4: memref<1x8x128xf32, #tpu.memory_space<vmem>>, %arg5: memref<1x1x6x128x128xbf16, #tpu.memory_space<vmem>>, %arg6: memref<1x1x16x128xf32, #tpu.memory_space<vmem>>, %arg7: memref<1x128x128xbf16, #tpu.memory_space<vmem>>, %arg8: memref<1x16x128xf32, #tpu.memory_space<vmem>>, %arg9: memref<16x128xf32, #tpu.memory_space<vmem>>) attributes {dimension_semantics = [#tpu.dimension_semantics<parallel>, #tpu.dimension_semantics<arbitrary>], iteration_bounds = array<i64: 2, 2>, scalar_prefetch = 0 : i64, scratch_operands = 1 : i64, tpu.core_type = #tpu.core_type<tc>, window_params = [{transform_indices = @transform_0, window_bounds = array<i64: 1, 16, 128>}, {pipeline_mode = #tpu.pipeline_mode<synchronous>, transform_indices = @transform_1, window_bounds = array<i64: 64, 16>}, {transform_indices = @transform_2, window_bounds = array<i64: 1, 8, 128>}, {transform_indices = @transform_3, window_bounds = array<i64: 1, 1, 6, 128, 128>}, {transform_indices = @transform_4, window_bounds = array<i64: 1, 1, 16, 128>}, {transform_indices = @transform_5, window_bounds = array<i64: 1, 128, 128>}, {transform_indices = @transform_6, window_bounds = array<i64: 1, 16, 128>}]} {
    %c0_i32 = arith.constant 0 : i32
    %0 = arith.cmpi eq, %arg0, %c0_i32 : i32
    %c2_i32 = arith.constant 2 : i32
    %c1_i32 = arith.constant 1 : i32
    %1 = arith.select %0, %c2_i32, %c1_i32 : i32
    %2 = tpu.iota {dimensions = array<i32: 1>} : vector<1x128xi32>
    %c32_i32 = arith.constant 32 : i32
    %3 = vector.broadcast %c32_i32 : i32 to vector<1x128xi32>
    %4 = arith.cmpi slt, %2, %3 : vector<1x128xi32>
    %5 = arith.extui %4 : vector<1x128xi1> to vector<1x128xi32>
    %6 = arith.sitofp %5 : vector<1x128xi32> to vector<1x128xf32>
    %c0_i32_0 = arith.constant 0 : i32
    %7 = arith.cmpi eq, %arg1, %c0_i32_0 : i32
    %8 = arith.extui %7 : i1 to i32
    %c0_i32_1 = arith.constant 0 : i32
    %9 = arith.cmpi ne, %8, %c0_i32_1 : i32
    scf.if %9 {
      %c0 = arith.constant 0 : index
      %c0_5 = arith.constant 0 : index
      %c0_6 = arith.constant 0 : index
      %16 = vector.load %arg2[%c0, %c0_5, %c0_6] : memref<1x16x128xf32, #tpu.memory_space<vmem>>, vector<1x16x128xf32>
      %17 = vector.shape_cast %16 : vector<1x16x128xf32> to vector<16x128xf32>
      %c0_7 = arith.constant 0 : index
      %c0_8 = arith.constant 0 : index
      %c0_9 = arith.constant 0 : index
      %18 = vector.load %arg4[%c0_7, %c0_8, %c0_9] : memref<1x8x128xf32, #tpu.memory_space<vmem>>, vector<1x1x128xf32>
      %19 = vector.shape_cast %18 : vector<1x1x128xf32> to vector<1x128xf32>
      %c0_10 = arith.constant 0 : index
      %c1 = arith.constant 1 : index
      %c0_11 = arith.constant 0 : index
      %20 = vector.load %arg4[%c0_10, %c1, %c0_11] : memref<1x8x128xf32, #tpu.memory_space<vmem>>, vector<1x1x128xf32>
      %21 = vector.shape_cast %20 : vector<1x1x128xf32> to vector<1x128xf32>
      %22 = vector.broadcast %6 : vector<1x128xf32> to vector<16x128xf32>
      %23 = arith.mulf %17, %22 : vector<16x128xf32>
      %cst = arith.constant dense<0.000000e+00> : vector<16xf32>
      %24 = vector.multi_reduction <add>, %23, %cst [1] : vector<16x128xf32> to vector<16xf32>
      %25 = vector.shape_cast %24 : vector<16xf32> to vector<16x1xf32>
      %cst_12 = arith.constant 3.125000e-02 : f32
      %26 = vector.broadcast %cst_12 : f32 to vector<16x1xf32>
      %27 = arith.mulf %25, %26 : vector<16x1xf32>
      %28 = vector.broadcast %27 : vector<16x1xf32> to vector<16x128xf32>
      %29 = arith.subf %17, %28 : vector<16x128xf32>
      %30 = vector.broadcast %6 : vector<1x128xf32> to vector<16x128xf32>
      %31 = arith.mulf %29, %30 : vector<16x128xf32>
      %32 = arith.mulf %31, %31 : vector<16x128xf32>
      %cst_13 = arith.constant dense<0.000000e+00> : vector<16xf32>
      %33 = vector.multi_reduction <add>, %32, %cst_13 [1] : vector<16x128xf32> to vector<16xf32>
      %34 = vector.shape_cast %33 : vector<16xf32> to vector<16x1xf32>
      %cst_14 = arith.constant 3.125000e-02 : f32
      %35 = vector.broadcast %cst_14 : f32 to vector<16x1xf32>
      %36 = arith.mulf %34, %35 : vector<16x1xf32>
      %cst_15 = arith.constant 9.99999996E-13 : f32
      %37 = vector.broadcast %cst_15 : f32 to vector<16x1xf32>
      %38 = arith.addf %36, %37 : vector<16x1xf32>
      %39 = math.rsqrt %38 : vector<16x1xf32>
      %40 = vector.broadcast %39 : vector<16x1xf32> to vector<16x128xf32>
      %41 = arith.mulf %31, %40 : vector<16x128xf32>
      %42 = vector.broadcast %19 : vector<1x128xf32> to vector<16x128xf32>
      %43 = arith.mulf %41, %42 : vector<16x128xf32>
      %44 = vector.broadcast %21 : vector<1x128xf32> to vector<16x128xf32>
      %45 = arith.addf %43, %44 : vector<16x128xf32>
      %c0_16 = arith.constant 0 : index
      %c0_17 = arith.constant 0 : index
      %46 = vector.load %arg9[%c0_16, %c0_17] : memref<16x128xf32, #tpu.memory_space<vmem>>, vector<16x128xf32>
      tpu.vector_store %arg9[%c0_16, %c0_17], %45 {strides = array<i32>} : memref<16x128xf32, #tpu.memory_space<vmem>>, vector<16x128xf32>,
    } else {
    }
    %10 = arith.cmpi slt, %arg1, %1 : i32
    %11 = arith.extui %10 : i1 to i32
    %c0_i32_2 = arith.constant 0 : i32
    %12 = arith.cmpi ne, %11, %c0_i32_2 : i32
    scf.if %12 {
      %c0 = arith.constant 0 : index
      %c0_5 = arith.constant 0 : index
      %16 = vector.load %arg9[%c0, %c0_5] : memref<16x128xf32, #tpu.memory_space<vmem>>, vector<16x128xf32>
      %17 = arith.truncf %16 : vector<16x128xf32> to vector<16x128xbf16>
      %c0_6 = arith.constant 0 : index
      %c0_7 = arith.constant 0 : index
      %c0_8 = arith.constant 0 : index
      %c0_9 = arith.constant 0 : index
      %c0_10 = arith.constant 0 : index
      %18 = vector.load %arg5[%c0_6, %c0_7, %c0_8, %c0_9, %c0_10] : memref<1x1x6x128x128xbf16, #tpu.memory_space<vmem>>, vector<1x1x1x128x128xbf16>
      %19 = vector.shape_cast %18 : vector<1x1x1x128x128xbf16> to vector<128x128xbf16>
      %cst = arith.constant dense<0.000000e+00> : vector<16x128xf32>
      %20 = tpu.matmul %17, %19, %cst {dimension_numbers = #tpu.dot_dimension_numbers<[1], [0], [0], [1], [0, 0, 1, 1], [], []>} : vector<16x128xbf16>, vector<128x128xbf16>, vector<16x128xf32> -> vector<16x128xf32>
      %c0_11 = arith.constant 0 : index
      %c0_12 = arith.constant 0 : index
      %c0_13 = arith.constant 0 : index
      %c0_14 = arith.constant 0 : index
      %21 = vector.load %arg6[%c0_11, %c0_12, %c0_13, %c0_14] : memref<1x1x16x128xf32, #tpu.memory_space<vmem>>, vector<1x1x1x128xf32>
      %22 = vector.shape_cast %21 : vector<1x1x1x128xf32> to vector<1x128xf32>
      %23 = vector.broadcast %22 : vector<1x128xf32> to vector<16x128xf32>
      %24 = arith.addf %20, %23 : vector<16x128xf32>
      %c0_15 = arith.constant 0 : index
      %c0_16 = arith.constant 0 : index
      %c1 = arith.constant 1 : index
      %c0_17 = arith.constant 0 : index
      %c0_18 = arith.constant 0 : index
      %25 = vector.load %arg5[%c0_15, %c0_16, %c1, %c0_17, %c0_18] : memref<1x1x6x128x128xbf16, #tpu.memory_space<vmem>>, vector<1x1x1x128x128xbf16>
      %26 = vector.shape_cast %25 : vector<1x1x1x128x128xbf16> to vector<128x128xbf16>
      %cst_19 = arith.constant dense<0.000000e+00> : vector<16x128xf32>
      %27 = tpu.matmul %17, %26, %cst_19 {dimension_numbers = #tpu.dot_dimension_numbers<[1], [0], [0], [1], [0, 0, 1, 1], [], []>} : vector<16x128xbf16>, vector<128x128xbf16>, vector<16x128xf32> -> vector<16x128xf32>
      %c0_20 = arith.constant 0 : index
      %c0_21 = arith.constant 0 : index
      %c1_22 = arith.constant 1 : index
      %c0_23 = arith.constant 0 : index
      %28 = vector.load %arg6[%c0_20, %c0_21, %c1_22, %c0_23] : memref<1x1x16x128xf32, #tpu.memory_space<vmem>>, vector<1x1x1x128xf32>
      %29 = vector.shape_cast %28 : vector<1x1x1x128xf32> to vector<1x128xf32>
      %30 = vector.broadcast %29 : vector<1x128xf32> to vector<16x128xf32>
      %31 = arith.addf %27, %30 : vector<16x128xf32>
      %c0_24 = arith.constant 0 : index
      %c0_25 = arith.constant 0 : index
      %c2 = arith.constant 2 : index
      %c0_26 = arith.constant 0 : index
      %c0_27 = arith.constant 0 : index
      %32 = vector.load %arg5[%c0_24, %c0_25, %c2, %c0_26, %c0_27] : memref<1x1x6x128x128xbf16, #tpu.memory_space<vmem>>, vector<1x1x1x128x128xbf16>
      %33 = vector.shape_cast %32 : vector<1x1x1x128x128xbf16> to vector<128x128xbf16>
      %cst_28 = arith.constant dense<0.000000e+00> : vector<16x128xf32>
      %34 = tpu.matmul %17, %33, %cst_28 {dimension_numbers = #tpu.dot_dimension_numbers<[1], [0], [0], [1], [0, 0, 1, 1], [], []>} : vector<16x128xbf16>, vector<128x128xbf16>, vector<16x128xf32> -> vector<16x128xf32>
      %c0_29 = arith.constant 0 : index
      %c0_30 = arith.constant 0 : index
      %c2_31 = arith.constant 2 : index
      %c0_32 = arith.constant 0 : index
      %35 = vector.load %arg6[%c0_29, %c0_30, %c2_31, %c0_32] : memref<1x1x16x128xf32, #tpu.memory_space<vmem>>, vector<1x1x1x128xf32>
      %36 = vector.shape_cast %35 : vector<1x1x1x128xf32> to vector<1x128xf32>
      %37 = vector.broadcast %36 : vector<1x128xf32> to vector<16x128xf32>
      %38 = arith.addf %34, %37 : vector<16x128xf32>
      %39 = tpu.iota {dimensions = array<i32: 1>} : vector<1x128xi32>
      %c0_i32_33 = arith.constant 0 : i32
      %40 = vector.broadcast %c0_i32_33 : i32 to vector<1x128xi32>
      %41 = arith.cmpi sge, %39, %40 : vector<1x128xi32>
      %c8_i32 = arith.constant 8 : i32
      %42 = vector.broadcast %c8_i32 : i32 to vector<1x128xi32>
      %43 = arith.cmpi slt, %39, %42 : vector<1x128xi32>
      %44 = arith.andi %41, %43 : vector<1x128xi1>
      %45 = arith.extui %44 : vector<1x128xi1> to vector<1x128xi32>
      %46 = arith.sitofp %45 : vector<1x128xi32> to vector<1x128xf32>
      %47 = tpu.iota {dimensions = array<i32: 1>} : vector<1x128xi32>
      %c8_i32_34 = arith.constant 8 : i32
      %48 = vector.broadcast %c8_i32_34 : i32 to vector<1x128xi32>
      %49 = arith.cmpi sge, %47, %48 : vector<1x128xi32>
      %c16_i32 = arith.constant 16 : i32
      %50 = vector.broadcast %c16_i32 : i32 to vector<1x128xi32>
      %51 = arith.cmpi slt, %47, %50 : vector<1x128xi32>
      %52 = arith.andi %49, %51 : vector<1x128xi1>
      %53 = arith.extui %52 : vector<1x128xi1> to vector<1x128xi32>
      %54 = arith.sitofp %53 : vector<1x128xi32> to vector<1x128xf32>
      %55 = tpu.iota {dimensions = array<i32: 1>} : vector<1x128xi32>
      %c16_i32_35 = arith.constant 16 : i32
      %56 = vector.broadcast %c16_i32_35 : i32 to vector<1x128xi32>
      %57 = arith.cmpi sge, %55, %56 : vector<1x128xi32>
      %c24_i32 = arith.constant 24 : i32
      %58 = vector.broadcast %c24_i32 : i32 to vector<1x128xi32>
      %59 = arith.cmpi slt, %55, %58 : vector<1x128xi32>
      %60 = arith.andi %57, %59 : vector<1x128xi1>
      %61 = arith.extui %60 : vector<1x128xi1> to vector<1x128xi32>
      %62 = arith.sitofp %61 : vector<1x128xi32> to vector<1x128xf32>
      %63 = tpu.iota {dimensions = array<i32: 1>} : vector<1x128xi32>
      %c24_i32_36 = arith.constant 24 : i32
      %64 = vector.broadcast %c24_i32_36 : i32 to vector<1x128xi32>
      %65 = arith.cmpi sge, %63, %64 : vector<1x128xi32>
      %c32_i32_37 = arith.constant 32 : i32
      %66 = vector.broadcast %c32_i32_37 : i32 to vector<1x128xi32>
      %67 = arith.cmpi slt, %63, %66 : vector<1x128xi32>
      %68 = arith.andi %65, %67 : vector<1x128xi1>
      %69 = arith.extui %68 : vector<1x128xi1> to vector<1x128xi32>
      %70 = arith.sitofp %69 : vector<1x128xi32> to vector<1x128xf32>
      %71 = vector.broadcast %46 : vector<1x128xf32> to vector<16x128xf32>
      %72 = arith.mulf %24, %71 : vector<16x128xf32>
      %73 = vector.broadcast %54 : vector<1x128xf32> to vector<16x128xf32>
      %74 = arith.mulf %24, %73 : vector<16x128xf32>
      %75 = vector.broadcast %62 : vector<1x128xf32> to vector<16x128xf32>
      %76 = arith.mulf %24, %75 : vector<16x128xf32>
      %77 = vector.broadcast %70 : vector<1x128xf32> to vector<16x128xf32>
      %78 = arith.mulf %24, %77 : vector<16x128xf32>
      %79 = tpu.concatenate %72, %74, %76, %78 in 0 : vector<16x128xf32>, vector<16x128xf32>, vector<16x128xf32>, vector<16x128xf32> -> vector<64x128xf32>
      %cst_38 = arith.constant dense<0.000000e+00> : vector<64x16xf32>
      %80 = tpu.matmul %79, %31, %cst_38 {dimension_numbers = #tpu.dot_dimension_numbers<[1], [1], [0], [0], [0, 0, 1, 0], [], []>} : vector<64x128xf32>, vector<16x128xf32>, vector<64x16xf32> -> vector<64x16xf32>
      %c0_39 = arith.constant 0 : index
      %c0_40 = arith.constant 0 : index
      %81 = vector.load %arg3[%c0_39, %c0_40] : memref<64x16xf32, #tpu.memory_space<vmem>>, vector<64x16xf32>
      %82 = arith.addf %80, %81 : vector<64x16xf32>
      %cst_41 = arith.constant dense<0xFF800000> : vector<64xf32>
      %83 = vector.multi_reduction <maximumf>, %82, %cst_41 [1] : vector<64x16xf32> to vector<64xf32>
      %84 = vector.shape_cast %83 : vector<64xf32> to vector<64x1xf32>
      %85 = vector.broadcast %84 : vector<64x1xf32> to vector<64x16xf32>
      %86 = arith.subf %82, %85 : vector<64x16xf32>
      %87 = math.exp %86 : vector<64x16xf32>
      %cst_42 = arith.constant dense<0.000000e+00> : vector<64xf32>
      %88 = vector.multi_reduction <add>, %87, %cst_42 [1] : vector<64x16xf32> to vector<64xf32>
      %89 = vector.shape_cast %88 : vector<64xf32> to vector<64x1xf32>
      %90 = tpu.reciprocal %89 {approx = true} : vector<64x1xf32> -> vector<64x1xf32>
      %91 = vector.broadcast %90 : vector<64x1xf32> to vector<64x16xf32>
      %92 = arith.mulf %87, %91 : vector<64x16xf32>
      %cst_43 = arith.constant 0.000000e+00 : f32
      %93 = vector.broadcast %cst_43 : f32 to vector<16x128xf32>
      %94 = vector.extract_strided_slice %92 {offsets = [0, 0], sizes = [16, 16], strides = [1, 1]} : vector<64x16xf32> to vector<16x16xf32>
      %95 = vector.broadcast %46 : vector<1x128xf32> to vector<16x128xf32>
      %96 = arith.mulf %38, %95 : vector<16x128xf32>
      %cst_44 = arith.constant dense<0.000000e+00> : vector<16x128xf32>
      %97 = tpu.matmul %94, %96, %cst_44 {dimension_numbers = #tpu.dot_dimension_numbers<[1], [0], [0], [1], [0, 0, 1, 1], [], []>} : vector<16x16xf32>, vector<16x128xf32>, vector<16x128xf32> -> vector<16x128xf32>
      %98 = arith.addf %93, %97 : vector<16x128xf32>
      %99 = vector.extract_strided_slice %92 {offsets = [16, 0], sizes = [16, 16], strides = [1, 1]} : vector<64x16xf32> to vector<16x16xf32>
      %100 = vector.broadcast %54 : vector<1x128xf32> to vector<16x128xf32>
      %101 = arith.mulf %38, %100 : vector<16x128xf32>
      %cst_45 = arith.constant dense<0.000000e+00> : vector<16x128xf32>
      %102 = tpu.matmul %99, %101, %cst_45 {dimension_numbers = #tpu.dot_dimension_numbers<[1], [0], [0], [1], [0, 0, 1, 1], [], []>} : vector<16x16xf32>, vector<16x128xf32>, vector<16x128xf32> -> vector<16x128xf32>
      %103 = arith.addf %98, %102 : vector<16x128xf32>
      %104 = vector.extract_strided_slice %92 {offsets = [32, 0], sizes = [16, 16], strides = [1, 1]} : vector<64x16xf32> to vector<16x16xf32>
      %105 = vector.broadcast %62 : vector<1x128xf32> to vector<16x128xf32>
      %106 = arith.mulf %38, %105 : vector<16x128xf32>
      %cst_46 = arith.constant dense<0.000000e+00> : vector<16x128xf32>
      %107 = tpu.matmul %104, %106, %cst_46 {dimension_numbers = #tpu.dot_dimension_numbers<[1], [0], [0], [1], [0, 0, 1, 1], [], []>} : vector<16x16xf32>, vector<16x128xf32>, vector<16x128xf32> -> vector<16x128xf32>
      %108 = arith.addf %103, %107 : vector<16x128xf32>
      %109 = vector.extract_strided_slice %92 {offsets = [48, 0], sizes = [16, 16], strides = [1, 1]} : vector<64x16xf32> to vector<16x16xf32>
      %110 = vector.broadcast %70 : vector<1x128xf32> to vector<16x128xf32>
      %111 = arith.mulf %38, %110 : vector<16x128xf32>
      %cst_47 = arith.constant dense<0.000000e+00> : vector<16x128xf32>
      %112 = tpu.matmul %109, %111, %cst_47 {dimension_numbers = #tpu.dot_dimension_numbers<[1], [0], [0], [1], [0, 0, 1, 1], [], []>} : vector<16x16xf32>, vector<16x128xf32>, vector<16x128xf32> -> vector<16x128xf32>
      %113 = arith.addf %108, %112 : vector<16x128xf32>
      %114 = arith.truncf %113 : vector<16x128xf32> to vector<16x128xbf16>
      %c0_48 = arith.constant 0 : index
      %c0_49 = arith.constant 0 : index
      %c3 = arith.constant 3 : index
      %c0_50 = arith.constant 0 : index
      %c0_51 = arith.constant 0 : index
      %115 = vector.load %arg5[%c0_48, %c0_49, %c3, %c0_50, %c0_51] : memref<1x1x6x128x128xbf16, #tpu.memory_space<vmem>>, vector<1x1x1x128x128xbf16>
      %116 = vector.shape_cast %115 : vector<1x1x1x128x128xbf16> to vector<128x128xbf16>
      %cst_52 = arith.constant dense<0.000000e+00> : vector<16x128xf32>
      %117 = tpu.matmul %114, %116, %cst_52 {dimension_numbers = #tpu.dot_dimension_numbers<[1], [0], [0], [1], [0, 0, 1, 1], [], []>} : vector<16x128xbf16>, vector<128x128xbf16>, vector<16x128xf32> -> vector<16x128xf32>
      %c0_53 = arith.constant 0 : index
      %c0_54 = arith.constant 0 : index
      %c3_55 = arith.constant 3 : index
      %c0_56 = arith.constant 0 : index
      %118 = vector.load %arg6[%c0_53, %c0_54, %c3_55, %c0_56] : memref<1x1x16x128xf32, #tpu.memory_space<vmem>>, vector<1x1x1x128xf32>
      %119 = vector.shape_cast %118 : vector<1x1x1x128xf32> to vector<1x128xf32>
      %120 = vector.broadcast %119 : vector<1x128xf32> to vector<16x128xf32>
      %121 = arith.addf %117, %120 : vector<16x128xf32>
      %122 = arith.addf %16, %121 : vector<16x128xf32>
      %c0_57 = arith.constant 0 : index
      %c0_58 = arith.constant 0 : index
      %c4 = arith.constant 4 : index
      %c0_59 = arith.constant 0 : index
      %123 = vector.load %arg6[%c0_57, %c0_58, %c4, %c0_59] : memref<1x1x16x128xf32, #tpu.memory_space<vmem>>, vector<1x1x1x128xf32>
      %124 = vector.shape_cast %123 : vector<1x1x1x128xf32> to vector<1x128xf32>
      %c0_60 = arith.constant 0 : index
      %c0_61 = arith.constant 0 : index
      %c5 = arith.constant 5 : index
      %c0_62 = arith.constant 0 : index
      %125 = vector.load %arg6[%c0_60, %c0_61, %c5, %c0_62] : memref<1x1x16x128xf32, #tpu.memory_space<vmem>>, vector<1x1x1x128xf32>
      %126 = vector.shape_cast %125 : vector<1x1x1x128xf32> to vector<1x128xf32>
      %127 = vector.broadcast %6 : vector<1x128xf32> to vector<16x128xf32>
      %128 = arith.mulf %122, %127 : vector<16x128xf32>
      %cst_63 = arith.constant dense<0.000000e+00> : vector<16xf32>
      %129 = vector.multi_reduction <add>, %128, %cst_63 [1] : vector<16x128xf32> to vector<16xf32>
      %130 = vector.shape_cast %129 : vector<16xf32> to vector<16x1xf32>
      %cst_64 = arith.constant 3.125000e-02 : f32
      %131 = vector.broadcast %cst_64 : f32 to vector<16x1xf32>
      %132 = arith.mulf %130, %131 : vector<16x1xf32>
      %133 = vector.broadcast %132 : vector<16x1xf32> to vector<16x128xf32>
      %134 = arith.subf %122, %133 : vector<16x128xf32>
      %135 = vector.broadcast %6 : vector<1x128xf32> to vector<16x128xf32>
      %136 = arith.mulf %134, %135 : vector<16x128xf32>
      %137 = arith.mulf %136, %136 : vector<16x128xf32>
      %cst_65 = arith.constant dense<0.000000e+00> : vector<16xf32>
      %138 = vector.multi_reduction <add>, %137, %cst_65 [1] : vector<16x128xf32> to vector<16xf32>
      %139 = vector.shape_cast %138 : vector<16xf32> to vector<16x1xf32>
      %cst_66 = arith.constant 3.125000e-02 : f32
      %140 = vector.broadcast %cst_66 : f32 to vector<16x1xf32>
      %141 = arith.mulf %139, %140 : vector<16x1xf32>
      %cst_67 = arith.constant 9.99999996E-13 : f32
      %142 = vector.broadcast %cst_67 : f32 to vector<16x1xf32>
      %143 = arith.addf %141, %142 : vector<16x1xf32>
      %144 = math.rsqrt %143 : vector<16x1xf32>
      %145 = vector.broadcast %144 : vector<16x1xf32> to vector<16x128xf32>
      %146 = arith.mulf %136, %145 : vector<16x128xf32>
      %147 = vector.broadcast %124 : vector<1x128xf32> to vector<16x128xf32>
      %148 = arith.mulf %146, %147 : vector<16x128xf32>
      %149 = vector.broadcast %126 : vector<1x128xf32> to vector<16x128xf32>
      %150 = arith.addf %148, %149 : vector<16x128xf32>
      %151 = arith.truncf %150 : vector<16x128xf32> to vector<16x128xbf16>
      %c0_68 = arith.constant 0 : index
      %c0_69 = arith.constant 0 : index
      %c4_70 = arith.constant 4 : index
      %c0_71 = arith.constant 0 : index
      %c0_72 = arith.constant 0 : index
      %152 = vector.load %arg5[%c0_68, %c0_69, %c4_70, %c0_71, %c0_72] : memref<1x1x6x128x128xbf16, #tpu.memory_space<vmem>>, vector<1x1x1x128x128xbf16>
      %153 = vector.shape_cast %152 : vector<1x1x1x128x128xbf16> to vector<128x128xbf16>
      %cst_73 = arith.constant dense<0.000000e+00> : vector<16x128xf32>
      %154 = tpu.matmul %151, %153, %cst_73 {dimension_numbers = #tpu.dot_dimension_numbers<[1], [0], [0], [1], [0, 0, 1, 1], [], []>} : vector<16x128xbf16>, vector<128x128xbf16>, vector<16x128xf32> -> vector<16x128xf32>
      %c0_74 = arith.constant 0 : index
      %c0_75 = arith.constant 0 : index
      %c6 = arith.constant 6 : index
      %c0_76 = arith.constant 0 : index
      %155 = vector.load %arg6[%c0_74, %c0_75, %c6, %c0_76] : memref<1x1x16x128xf32, #tpu.memory_space<vmem>>, vector<1x1x1x128xf32>
      %156 = vector.shape_cast %155 : vector<1x1x1x128xf32> to vector<1x128xf32>
      %157 = vector.broadcast %156 : vector<1x128xf32> to vector<16x128xf32>
      %158 = arith.addf %154, %157 : vector<16x128xf32>
      %cst_77 = arith.constant 5.000000e-01 : f32
      %159 = vector.broadcast %cst_77 : f32 to vector<16x128xf32>
      %160 = arith.mulf %159, %158 : vector<16x128xf32>
      %cst_78 = arith.constant 4.471500e-02 : f32
      %161 = vector.broadcast %cst_78 : f32 to vector<16x128xf32>
      %162 = arith.mulf %161, %158 : vector<16x128xf32>
      %163 = arith.mulf %162, %158 : vector<16x128xf32>
      %164 = arith.mulf %163, %158 : vector<16x128xf32>
      %165 = arith.addf %158, %164 : vector<16x128xf32>
      %cst_79 = arith.constant 0.797884583 : f32
      %166 = vector.broadcast %cst_79 : f32 to vector<16x128xf32>
      %167 = arith.mulf %166, %165 : vector<16x128xf32>
      %168 = math.tanh %167 : vector<16x128xf32>
      %cst_80 = arith.constant 1.000000e+00 : f32
      %169 = vector.broadcast %cst_80 : f32 to vector<16x128xf32>
      %170 = arith.addf %169, %168 : vector<16x128xf32>
      %171 = arith.mulf %160, %170 : vector<16x128xf32>
      %172 = arith.truncf %171 : vector<16x128xf32> to vector<16x128xbf16>
      %c0_81 = arith.constant 0 : index
      %c0_82 = arith.constant 0 : index
      %c5_83 = arith.constant 5 : index
      %c0_84 = arith.constant 0 : index
      %c0_85 = arith.constant 0 : index
      %173 = vector.load %arg5[%c0_81, %c0_82, %c5_83, %c0_84, %c0_85] : memref<1x1x6x128x128xbf16, #tpu.memory_space<vmem>>, vector<1x1x1x128x128xbf16>
      %174 = vector.shape_cast %173 : vector<1x1x1x128x128xbf16> to vector<128x128xbf16>
      %cst_86 = arith.constant dense<0.000000e+00> : vector<16x128xf32>
      %175 = tpu.matmul %172, %174, %cst_86 {dimension_numbers = #tpu.dot_dimension_numbers<[1], [0], [0], [1], [0, 0, 1, 1], [], []>} : vector<16x128xbf16>, vector<128x128xbf16>, vector<16x128xf32> -> vector<16x128xf32>
      %c0_87 = arith.constant 0 : index
      %c0_88 = arith.constant 0 : index
      %c7 = arith.constant 7 : index
      %c0_89 = arith.constant 0 : index
      %176 = vector.load %arg6[%c0_87, %c0_88, %c7, %c0_89] : memref<1x1x16x128xf32, #tpu.memory_space<vmem>>, vector<1x1x1x128xf32>
      %177 = vector.shape_cast %176 : vector<1x1x1x128xf32> to vector<1x128xf32>
      %178 = vector.broadcast %177 : vector<1x128xf32> to vector<16x128xf32>
      %179 = arith.addf %175, %178 : vector<16x128xf32>
      %180 = arith.addf %150, %179 : vector<16x128xf32>
      %c0_90 = arith.constant 0 : index
      %c0_91 = arith.constant 0 : index
      %c8 = arith.constant 8 : index
      %c0_92 = arith.constant 0 : index
      %181 = vector.load %arg6[%c0_90, %c0_91, %c8, %c0_92] : memref<1x1x16x128xf32, #tpu.memory_space<vmem>>, vector<1x1x1x128xf32>
      %182 = vector.shape_cast %181 : vector<1x1x1x128xf32> to vector<1x128xf32>
      %c0_93 = arith.constant 0 : index
      %c0_94 = arith.constant 0 : index
      %c9 = arith.constant 9 : index
      %c0_95 = arith.constant 0 : index
      %183 = vector.load %arg6[%c0_93, %c0_94, %c9, %c0_95] : memref<1x1x16x128xf32, #tpu.memory_space<vmem>>, vector<1x1x1x128xf32>
      %184 = vector.shape_cast %183 : vector<1x1x1x128xf32> to vector<1x128xf32>
      %185 = vector.broadcast %6 : vector<1x128xf32> to vector<16x128xf32>
      %186 = arith.mulf %180, %185 : vector<16x128xf32>
      %cst_96 = arith.constant dense<0.000000e+00> : vector<16xf32>
      %187 = vector.multi_reduction <add>, %186, %cst_96 [1] : vector<16x128xf32> to vector<16xf32>
      %188 = vector.shape_cast %187 : vector<16xf32> to vector<16x1xf32>
      %cst_97 = arith.constant 3.125000e-02 : f32
      %189 = vector.broadcast %cst_97 : f32 to vector<16x1xf32>
      %190 = arith.mulf %188, %189 : vector<16x1xf32>
      %191 = vector.broadcast %190 : vector<16x1xf32> to vector<16x128xf32>
      %192 = arith.subf %180, %191 : vector<16x128xf32>
      %193 = vector.broadcast %6 : vector<1x128xf32> to vector<16x128xf32>
      %194 = arith.mulf %192, %193 : vector<16x128xf32>
      %195 = arith.mulf %194, %194 : vector<16x128xf32>
      %cst_98 = arith.constant dense<0.000000e+00> : vector<16xf32>
      %196 = vector.multi_reduction <add>, %195, %cst_98 [1] : vector<16x128xf32> to vector<16xf32>
      %197 = vector.shape_cast %196 : vector<16xf32> to vector<16x1xf32>
      %cst_99 = arith.constant 3.125000e-02 : f32
      %198 = vector.broadcast %cst_99 : f32 to vector<16x1xf32>
      %199 = arith.mulf %197, %198 : vector<16x1xf32>
      %cst_100 = arith.constant 9.99999996E-13 : f32
      %200 = vector.broadcast %cst_100 : f32 to vector<16x1xf32>
      %201 = arith.addf %199, %200 : vector<16x1xf32>
      %202 = math.rsqrt %201 : vector<16x1xf32>
      %203 = vector.broadcast %202 : vector<16x1xf32> to vector<16x128xf32>
      %204 = arith.mulf %194, %203 : vector<16x128xf32>
      %205 = vector.broadcast %182 : vector<1x128xf32> to vector<16x128xf32>
      %206 = arith.mulf %204, %205 : vector<16x128xf32>
      %207 = vector.broadcast %184 : vector<1x128xf32> to vector<16x128xf32>
      %208 = arith.addf %206, %207 : vector<16x128xf32>
      %c0_101 = arith.constant 0 : index
      %c0_102 = arith.constant 0 : index
      %209 = vector.load %arg9[%c0_101, %c0_102] : memref<16x128xf32, #tpu.memory_space<vmem>>, vector<16x128xf32>
      tpu.vector_store %arg9[%c0_101, %c0_102], %208 {strides = array<i32>} : memref<16x128xf32, #tpu.memory_space<vmem>>, vector<16x128xf32>,
    } else {
    }
    %c1_i32_3 = arith.constant 1 : i32
    %13 = arith.cmpi eq, %arg1, %c1_i32_3 : i32
    %14 = arith.extui %13 : i1 to i32
    %c0_i32_4 = arith.constant 0 : i32
    %15 = arith.cmpi ne, %14, %c0_i32_4 : i32
    scf.if %15 {
      %c0 = arith.constant 0 : index
      %c0_5 = arith.constant 0 : index
      %16 = vector.load %arg9[%c0, %c0_5] : memref<16x128xf32, #tpu.memory_space<vmem>>, vector<16x128xf32>
      %17 = arith.truncf %16 : vector<16x128xf32> to vector<16x128xbf16>
      %c0_6 = arith.constant 0 : index
      %c0_7 = arith.constant 0 : index
      %c0_8 = arith.constant 0 : index
      %18 = vector.load %arg7[%c0_6, %c0_7, %c0_8] : memref<1x128x128xbf16, #tpu.memory_space<vmem>>, vector<1x128x128xbf16>
      %19 = vector.shape_cast %18 : vector<1x128x128xbf16> to vector<128x128xbf16>
      %cst = arith.constant dense<0.000000e+00> : vector<16x128xf32>
      %20 = tpu.matmul %17, %19, %cst {dimension_numbers = #tpu.dot_dimension_numbers<[1], [0], [0], [1], [0, 0, 1, 1], [], []>} : vector<16x128xbf16>, vector<128x128xbf16>, vector<16x128xf32> -> vector<16x128xf32>
      %c0_9 = arith.constant 0 : index
      %c2 = arith.constant 2 : index
      %c0_10 = arith.constant 0 : index
      %21 = vector.load %arg4[%c0_9, %c2, %c0_10] : memref<1x8x128xf32, #tpu.memory_space<vmem>>, vector<1x1x128xf32>
      %22 = vector.shape_cast %21 : vector<1x1x128xf32> to vector<1x128xf32>
      %23 = vector.broadcast %22 : vector<1x128xf32> to vector<16x128xf32>
      %24 = arith.addf %20, %23 : vector<16x128xf32>
      %c0_11 = arith.constant 0 : index
      %c0_12 = arith.constant 0 : index
      %c0_13 = arith.constant 0 : index
      %25 = vector.load %arg8[%c0_11, %c0_12, %c0_13] : memref<1x16x128xf32, #tpu.memory_space<vmem>>, vector<1x16x128xf32>
      %26 = vector.shape_cast %25 : vector<1x16x128xf32> to vector<16x128xf32>
      %27 = vector.shape_cast %24 : vector<16x128xf32> to vector<1x16x128xf32>
      tpu.vector_store %arg8[%c0_11, %c0_12, %c0_13], %27 {strides = array<i32>} : memref<1x16x128xf32, #tpu.memory_space<vmem>>, vector<1x16x128xf32>,
    } else {
    }
    return
  }
  func.func @transform_0(%arg0: i32, %arg1: i32) -> (i32, i32, i32) {
    %c0_i32 = arith.constant 0 : i32
    %c0_i32_0 = arith.constant 0 : i32
    %c0_i32_1 = arith.constant 0 : i32
    return %arg0, %c0_i32, %c0_i32_0 : i32, i32, i32
  }
  func.func @transform_1(%arg0: i32, %arg1: i32) -> (i32, i32) {
    %c0_i32 = arith.constant 0 : i32
    %c0_i32_0 = arith.constant 0 : i32
    %c0_i32_1 = arith.constant 0 : i32
    return %c0_i32, %c0_i32_0 : i32, i32
  }
  func.func @transform_2(%arg0: i32, %arg1: i32) -> (i32, i32, i32) {
    %c0_i32 = arith.constant 0 : i32
    %c0_i32_0 = arith.constant 0 : i32
    %c0_i32_1 = arith.constant 0 : i32
    return %arg0, %c0_i32, %c0_i32_0 : i32, i32, i32
  }
  func.func @transform_3(%arg0: i32, %arg1: i32) -> (i32, i32, i32, i32, i32) {
    %c0_i32 = arith.constant 0 : i32
    %c0_i32_0 = arith.constant 0 : i32
    %c0_i32_1 = arith.constant 0 : i32
    %c0_i32_2 = arith.constant 0 : i32
    return %arg0, %arg1, %c0_i32, %c0_i32_0, %c0_i32_1 : i32, i32, i32, i32, i32
  }
  func.func @transform_4(%arg0: i32, %arg1: i32) -> (i32, i32, i32, i32) {
    %c0_i32 = arith.constant 0 : i32
    %c0_i32_0 = arith.constant 0 : i32
    %c0_i32_1 = arith.constant 0 : i32
    return %arg0, %arg1, %c0_i32, %c0_i32_0 : i32, i32, i32, i32
  }
  func.func @transform_5(%arg0: i32, %arg1: i32) -> (i32, i32, i32) {
    %c0_i32 = arith.constant 0 : i32
    %c0_i32_0 = arith.constant 0 : i32
    %c0_i32_1 = arith.constant 0 : i32
    return %arg0, %c0_i32, %c0_i32_0 : i32, i32, i32
  }
  func.func @transform_6(%arg0: i32, %arg1: i32) -> (i32, i32, i32) {
    %c0_i32 = arith.constant 0 : i32
    %c0_i32_0 = arith.constant 0 : i32
    %c0_i32_1 = arith.constant 0 : i32
    return %arg0, %c0_i32, %c0_i32_0 : i32, i32, i32
  }
}

</mosaic_0001>

<llo_original>
// kernel: distilbert_student_forward.1
$region0: #{distilbert_student_forward.1}
  #allocation0 [shape = 'u32[]', space=smem, size = 0x4, offset = 0x4, fixed_abs, tag = 'smem constant byte address 0x4 - core index']
  #allocation1 [shape = 'u32[144,128]{1,0:T(1,128)}', space=vmem, size = 0x12000, scoped, tag = 'internal scratch']
  #allocation2 [shape = 'f32[16,128]{1,0:T(8,128)}', space=vmem, size = 0x2000, scoped, tag = 'scratch operand']
  %s0 = inlined_call_operand.vmem [shape: f32[2,16,128], index: 0, kind: input, shape index: {}]
  %s1 = inlined_call_operand.vmem [shape: f32[64,16], index: 1, kind: input, shape index: {}]
  %s2 = inlined_call_operand.vmem [shape: f32[2,8,128], index: 2, kind: input, shape index: {}]
  %s3 = inlined_call_operand.hbm [shape: bf16[2,2,6,128,128], index: 3, kind: input, shape index: {}]
  %s4 = inlined_call_operand.vmem [shape: f32[2,2,16,128], index: 4, kind: input, shape index: {}]
  %s5 = inlined_call_operand.vmem [shape: bf16[2,128,128], index: 5, kind: input, shape index: {}]
  %s6 = inlined_call_operand.vmem [shape: f32[2,16,128], index: 6, kind: output, shape index: {}]
  %s7 = sld [smem:[#allocation0]]
  $region73: #{distilbert_student_forward.1} parent=0
    _
  %s9 = ssub.s32 1, %s7
  %s10 = scalar_select 0, %s9, %s7
  $region1: #{distilbert_student_forward.1} parent=0
    #allocation3 [shape = 'u8[393216]{0}', space=vmem, size = 0x60000, scoped, tag = 'input window, operand 3']
    #allocation4 [shape = 's32[2]{0}', space=sflag, size = 0x8, scoped, tag = 'scoped memory for distilbert_student_forward.1']
    %11 = vsyncpa [#allocation4], 0
    %s12 = scalar_lea.sflag [#allocation4], 1
    %13 = vsyncpa %s12, 0
    loop: start=0, step=1, limit=6
    $region2: #{distilbert_student_forward.1} parent=1 // loop_pre_header
      _
    $region3: #{distilbert_student_forward.1} parent=1 // loop_header
      %s15 = sphi 0, %s19
      %p16 = scmp.ge.s32.totalorder %s15, 6
      %s22 = sphi 0, %s34
      %s23 = sphi 0, %s30
      %s24 = sphi 0, %s22
      %s25 = sphi 0, %s23
      %s26 = sphi 0, %s24
      %s27 = sphi 0, %s25
      %s37 = sphi 0, %s39
      %s40 = sphi 0, %s37
      %s41 = sphi 0, %s40
      %s57 = sphi 0, %s41
      %s61 = sphi 0, %s61
      %s63 = sphi 0, %s61
      %s64 = sphi 0, %s63
      %s78 = sphi 0, %s64
      %s84 = sphi 0, %s86
      %s87 = sphi 0, %s84
      %s88 = sphi 0, %s87
      %s104 = sphi 0, %s88
      %s112 = sphi 0, %s114
      %s115 = sphi 0, %s112
      %s116 = sphi 0, %s115
      %s132 = sphi 0, %s116
      %s140 = sphi 0, %s142
      %s143 = sphi 0, %s140
      %s144 = sphi 0, %s143
      %s160 = sphi 0, %s144
      %s166 = sphi 0, %s168
      %s169 = sphi 0, %s166
      %s170 = sphi 0, %s169
      %s186 = sphi 0, %s170
      %s192 = sphi 0, %s194
      %s195 = sphi 0, %s192
      %s196 = sphi 0, %s195
      %s212 = sphi 0, %s196
    $region4: #{distilbert_student_forward.1} parent=1 // loop_header_branch
      %18 = sbr.rel (%p16) target = $region8
    $region5: #{distilbert_student_forward.1} parent=1 // loop_body
      %s20 = ssub.s32 %s15, 1
      %s21 = ssub.s32 %s15, 2
      %s28 = sadd.s32 1, %s23
      %p29 = scmp.ge.s32.totalorder %s28, 2
      %s30 = scalar_select %p29, 0, %s28
      %s31 = sadd.s32 1, %s22
      %s32 = scalar_select %p29, %s31, %s22
      %p33 = scmp.ge.s32.totalorder %s32, 2
      %s34 = scalar_select %p33, 0, %s32
      %s35 = ssub.s32 %s22, %s34
      %p36 = scmp.eq.s32.totalorder %s35, 0
      %s38 = sadd.s32 %s37, 1
      %s39 = scalar_select %p36, %s37, %s38
      %p42 = pneg %p36
      %p43 = scmp.eq.s32.totalorder %s15, 3
      %p44 = por %p42, %p43
      %p45 = scmp.ne.s32.totalorder %s37, %s40
      %p46 = scmp.eq.s32.totalorder %s15, 0
      %p47 = por %p45, %p46
      %p48 = scmp.ne.s32.totalorder %s37, %s40
      %p49 = scmp.eq.s32.totalorder %s20, 3
      %p50 = por %p48, %p49
      %p51 = scmp.ne.s32.totalorder %s40, %s41
      %p52 = scmp.eq.s32.totalorder %s20, 0
      %p53 = por %p51, %p52
      %p54 = scmp.ne.s32.totalorder %s40, %s41
      %p55 = scmp.eq.s32.totalorder %s21, 3
      %p56 = por %p54, %p55
      %p58 = scmp.ne.s32.totalorder %s41, %s57
      %p59 = scmp.eq.s32.totalorder %s21, 0
      %p60 = por %p58, %p59
      %s62 = sadd.s32 %s61, 1
      %p65 = scmp.eq.s32.totalorder %s15, 3
      %p66 = scmp.ne.s32.totalorder %s61, %s63
      %p67 = scmp.eq.s32.totalorder %s15, 0
      %p68 = por %p66, %p67
      %p69 = scmp.ne.s32.totalorder %s61, %s63
      %p70 = scmp.eq.s32.totalorder %s20, 3
      %p71 = por %p69, %p70
      %p72 = scmp.ne.s32.totalorder %s63, %s64
      %p73 = scmp.eq.s32.totalorder %s20, 0
      %p74 = por %p72, %p73
      %p75 = scmp.ne.s32.totalorder %s63, %s64
      %p76 = scmp.eq.s32.totalorder %s21, 3
      %p77 = por %p75, %p76
      %p79 = scmp.ne.s32.totalorder %s64, %s78
      %p80 = scmp.eq.s32.totalorder %s21, 0
      %p81 = por %p79, %p80
      %s82 = ssub.s32 %s22, %s34
      %p83 = scmp.eq.s32.totalorder %s82, 0
      %s85 = sadd.s32 %s84, 1
      %s86 = scalar_select %p83, %s84, %s85
      %p89 = pneg %p83
      %p90 = scmp.eq.s32.totalorder %s15, 3
      %p91 = por %p89, %p90
      %p92 = scmp.ne.s32.totalorder %s84, %s87
      %p93 = scmp.eq.s32.totalorder %s15, 0
      %p94 = por %p92, %p93
      %p95 = scmp.ne.s32.totalorder %s84, %s87
      %p96 = scmp.eq.s32.totalorder %s20, 3
      %p97 = por %p95, %p96
      %p98 = scmp.ne.s32.totalorder %s87, %s88
      %p99 = scmp.eq.s32.totalorder %s20, 0
      %p100 = por %p98, %p99
      %p101 = scmp.ne.s32.totalorder %s87, %s88
      %p102 = scmp.eq.s32.totalorder %s21, 3
      %p103 = por %p101, %p102
      %p105 = scmp.ne.s32.totalorder %s88, %s104
      %p106 = scmp.eq.s32.totalorder %s21, 0
      %p107 = por %p105, %p106
      %s108 = ssub.s32 %s22, %s34
      %s109 = ssub.s32 %s23, %s30
      %s110 = sor.u32 %s108, %s109
      %p111 = scmp.eq.s32.totalorder %s110, 0
      %s113 = sadd.s32 %s112, 1
      %s114 = scalar_select %p111, %s112, %s113
      %p117 = pneg %p111
      %p118 = scmp.eq.s32.totalorder %s15, 3
      %p119 = por %p117, %p118
      %p120 = scmp.ne.s32.totalorder %s112, %s115
      %p121 = scmp.eq.s32.totalorder %s15, 0
      %p122 = por %p120, %p121
      %p123 = scmp.ne.s32.totalorder %s112, %s115
      %p124 = scmp.eq.s32.totalorder %s20, 3
      %p125 = por %p123, %p124
      %p126 = scmp.ne.s32.totalorder %s115, %s116
      %p127 = scmp.eq.s32.totalorder %s20, 0
      %p128 = por %p126, %p127
      %p129 = scmp.ne.s32.totalorder %s115, %s116
      %p130 = scmp.eq.s32.totalorder %s21, 3
      %p131 = por %p129, %p130
      %p133 = scmp.ne.s32.totalorder %s116, %s132
      %p134 = scmp.eq.s32.totalorder %s21, 0
      %p135 = por %p133, %p134
      %s136 = ssub.s32 %s22, %s34
      %s137 = ssub.s32 %s23, %s30
      %s138 = sor.u32 %s136, %s137
      %p139 = scmp.eq.s32.totalorder %s138, 0
      %s141 = sadd.s32 %s140, 1
      %s142 = scalar_select %p139, %s140, %s141
      %p145 = pneg %p139
      %p146 = scmp.eq.s32.totalorder %s15, 3
      %p147 = por %p145, %p146
      %p148 = scmp.ne.s32.totalorder %s140, %s143
      %p149 = scmp.eq.s32.totalorder %s15, 0
      %p150 = por %p148, %p149
      %p151 = scmp.ne.s32.totalorder %s140, %s143
      %p152 = scmp.eq.s32.totalorder %s20, 3
      %p153 = por %p151, %p152
      %p154 = scmp.ne.s32.totalorder %s143, %s144
      %p155 = scmp.eq.s32.totalorder %s20, 0
      %p156 = por %p154, %p155
      %p157 = scmp.ne.s32.totalorder %s143, %s144
      %p158 = scmp.eq.s32.totalorder %s21, 3
      %p159 = por %p157, %p158
      %p161 = scmp.ne.s32.totalorder %s144, %s160
      %p162 = scmp.eq.s32.totalorder %s21, 0
      %p163 = por %p161, %p162
      %s164 = ssub.s32 %s22, %s34
      %p165 = scmp.eq.s32.totalorder %s164, 0
      %s167 = sadd.s32 %s166, 1
      %s168 = scalar_select %p165, %s166, %s167
      %p171 = pneg %p165
      %p172 = scmp.eq.s32.totalorder %s15, 3
      %p173 = por %p171, %p172
      %p174 = scmp.ne.s32.totalorder %s166, %s169
      %p175 = scmp.eq.s32.totalorder %s15, 0
      %p176 = por %p174, %p175
      %p177 = scmp.ne.s32.totalorder %s166, %s169
      %p178 = scmp.eq.s32.totalorder %s20, 3
      %p179 = por %p177, %p178
      %p180 = scmp.ne.s32.totalorder %s169, %s170
      %p181 = scmp.eq.s32.totalorder %s20, 0
      %p182 = por %p180, %p181
      %p183 = scmp.ne.s32.totalorder %s169, %s170
      %p184 = scmp.eq.s32.totalorder %s21, 3
      %p185 = por %p183, %p184
      %p187 = scmp.ne.s32.totalorder %s170, %s186
      %p188 = scmp.eq.s32.totalorder %s21, 0
      %p189 = por %p187, %p188
      %s190 = ssub.s32 %s22, %s34
      %p191 = scmp.eq.s32.totalorder %s190, 0
      %s193 = sadd.s32 %s192, 1
      %s194 = scalar_select %p191, %s192, %s193
      %p197 = pneg %p191
      %p198 = scmp.eq.s32.totalorder %s15, 3
      %p199 = por %p197, %p198
      %p200 = scmp.ne.s32.totalorder %s192, %s195
      %p201 = scmp.eq.s32.totalorder %s15, 0
      %p202 = por %p200, %p201
      %p203 = scmp.ne.s32.totalorder %s192, %s195
      %p204 = scmp.eq.s32.totalorder %s20, 3
      %p205 = por %p203, %p204
      %p206 = scmp.ne.s32.totalorder %s195, %s196
      %p207 = scmp.eq.s32.totalorder %s20, 0
      %p208 = por %p206, %p207
      %p209 = scmp.ne.s32.totalorder %s195, %s196
      %p210 = scmp.eq.s32.totalorder %s21, 3
      %p211 = por %p209, %p210
      %p213 = scmp.ne.s32.totalorder %s196, %s212
      %p214 = scmp.eq.s32.totalorder %s21, 0
      %p215 = por %p213, %p214
      %p216 = scmp.le.s32.totalorder 1, %s15
      %p217 = scmp.lt.s32.totalorder %s15, 5
      %p218 = pnand %p216, %p217
      %p219 = pneg %p218
      // Predicated region
      $region9: #{distilbert_student_forward.1} parent=5 // pred_check
        _
      $region10: #{distilbert_student_forward.1} parent=5 // pred_check_branch
        %221 = sbr.rel (%p218) target = $region12
      $region11: #{distilbert_student_forward.1} parent=5 // pred_region
        %s222 = ssub.s32 %s15, 1
        // Predicated region
        $region13: #{distilbert_student_forward.1} parent=11 // pred_check
          %p223 = pneg %p74
        $region14: #{distilbert_student_forward.1} parent=11 // pred_check_branch
          %225 = sbr.rel (%p223) target = $region16
        $region15: #{distilbert_student_forward.1} parent=11 // pred_region
          _
        $region16: #{distilbert_student_forward.1} parent=11 // pred_fallthru
          _
      $region12: #{distilbert_student_forward.1} parent=5 // pred_fallthru
        _
      %p226 = scmp.lt.s32.totalorder %s15, 4
      // Predicated region
      $region17: #{distilbert_student_forward.1} parent=5 // pred_check
        %p227 = pneg %p226
      $region18: #{distilbert_student_forward.1} parent=5 // pred_check_branch
        %229 = sbr.rel (%p227) target = $region20
      $region19: #{distilbert_student_forward.1} parent=5 // pred_region
        // Predicated region
        $region21: #{distilbert_student_forward.1} parent=19 // pred_check
          %p230 = pneg %p47
        $region22: #{distilbert_student_forward.1} parent=19 // pred_check_branch
          %232 = sbr.rel (%p230) target = $region24
        $region23: #{distilbert_student_forward.1} parent=19 // pred_region
          %p233 = scmp.lt.s32.totalorder %s22, 1
          %s234 = scalar_select %p233, %s22, 1
          %s235 = smul.addr %s234, 2
          %s236 = smul.addr %s235, 8
          %s237 = scalar_lea.vmem %s0, %s236
        $region24: #{distilbert_student_forward.1} parent=19 // pred_fallthru
          _
        // Predicated region
        $region25: #{distilbert_student_forward.1} parent=19 // pred_check
          %p238 = pneg %p94
        $region26: #{distilbert_student_forward.1} parent=19 // pred_check_branch
          %240 = sbr.rel (%p238) target = $region28
        $region27: #{distilbert_student_forward.1} parent=19 // pred_region
          %p241 = scmp.lt.s32.totalorder %s22, 1
          %s242 = scalar_select %p241, %s22, 1
          %s243 = smul.addr %s242, 8
          %s244 = scalar_lea.vmem %s2, %s243
        $region28: #{distilbert_student_forward.1} parent=19 // pred_fallthru
          _
        // Predicated region
        $region29: #{distilbert_student_forward.1} parent=19 // pred_check
          %p245 = pneg %p122
        $region30: #{distilbert_student_forward.1} parent=19 // pred_check_branch
          %247 = sbr.rel (%p245) target = $region32
        $region31: #{distilbert_student_forward.1} parent=19 // pred_region
          %s248 = sand.u32 %s112, 1
          %s249 = scalar_lea.sflag [#allocation4], %s248
          %s250 = sand.u32 %s112, 1
          %s251 = smul.addr %s250, 384
          %s252 = scalar_lea.vmem [#allocation3], %s251
          %s254 = ssub.s32 6144, 6144
          %255 = vsyncadd %s249, %s254
          %s256 = smul.addr %s23, 96
          %s257 = smul.addr %s22, 192
          %s258 = sadd.s32 %s256, %s257
          %s259 = smul.addr %s258, 64
          %s260 = scalar_lea.hbm %s3, %s259
          %s261 = sshll.u32 %s252, 4
          %s262 = int_to_ptr.vmem [resolvable:$true] %s261
          %267 = dma.hbm_to_vmem [thread:$0]  %s260, 6144, %s262, %s249, 64, 64, 4
        $region32: #{distilbert_student_forward.1} parent=19 // pred_fallthru
          _
        // Predicated region
        $region33: #{distilbert_student_forward.1} parent=19 // pred_check
          %p268 = pneg %p150
        $region34: #{distilbert_student_forward.1} parent=19 // pred_check_branch
          %270 = sbr.rel (%p268) target = $region36
        $region35: #{distilbert_student_forward.1} parent=19 // pred_region
          %p271 = scmp.lt.s32.totalorder %s22, 1
          %s272 = scalar_select %p271, %s22, 1
          %p273 = scmp.lt.s32.totalorder %s23, 1
          %s274 = scalar_select %p273, %s23, 1
          %s275 = smul.addr %s274, 2
          %s276 = smul.addr %s272, 4
          %s277 = sadd.s32 %s275, %s276
          %s278 = smul.addr %s277, 8
          %s279 = scalar_lea.vmem %s4, %s278
        $region36: #{distilbert_student_forward.1} parent=19 // pred_fallthru
          _
        // Predicated region
        $region37: #{distilbert_student_forward.1} parent=19 // pred_check
          %p280 = pneg %p176
        $region38: #{distilbert_student_forward.1} parent=19 // pred_check_branch
          %282 = sbr.rel (%p280) target = $region40
        $region39: #{distilbert_student_forward.1} parent=19 // pred_region
          %p283 = scmp.lt.s32.totalorder %s22, 1
          %s284 = scalar_select %p283, %s22, 1
          %s285 = smul.addr %s284, 16
          %s286 = smul.addr %s285, 4
          %s287 = scalar_lea.vmem %s5, %s286
        $region40: #{distilbert_student_forward.1} parent=19 // pred_fallthru
          _
      $region20: #{distilbert_student_forward.1} parent=5 // pred_fallthru
        _
      %p288 = scmp.le.s32.totalorder 1, %s15
      %p289 = scmp.lt.s32.totalorder %s15, 5
      %p290 = pnand %p288, %p289
      %p291 = pneg %p290
      // Predicated region
      $region41: #{distilbert_student_forward.1} parent=5 // pred_check
        _
      $region42: #{distilbert_student_forward.1} parent=5 // pred_check_branch
        %293 = sbr.rel (%p290) target = $region44
      $region43: #{distilbert_student_forward.1} parent=5 // pred_region
        %s294 = ssub.s32 %s15, 1
        %s295 = sand.u32 %s115, 1
        %s296 = scalar_lea.sflag [#allocation4], %s295
        %s297 = sand.u32 %s115, 1
        %s298 = smul.addr %s297, 384
        %s299 = scalar_lea.vmem [#allocation3], %s298
        // Predicated region
        $region45: #{distilbert_student_forward.1} parent=43 // pred_check
          %p300 = pneg %p128
        $region46: #{distilbert_student_forward.1} parent=43 // pred_check_branch
          %302 = sbr.rel (%p300) target = $region48
        $region47: #{distilbert_student_forward.1} parent=43 // pred_region
          %303 = dma.done %s296, 6144
        $region48: #{distilbert_student_forward.1} parent=43 // pred_fallthru
          _
        %p304 = scmp.lt.s32.totalorder %s24, 1
        %s305 = scalar_select %p304, %s24, 1
        %s306 = smul.addr %s305, 2
        %s307 = smul.addr %s306, 8
        %s308 = scalar_lea.vmem %s0, %s307
        %p309 = pneg %p53
        %p310 = pneg %p50
        %p311 = pneg %p74
        %p312 = pneg %p71
        %p313 = scmp.lt.s32.totalorder %s24, 1
        %s314 = scalar_select %p313, %s24, 1
        %s315 = smul.addr %s314, 8
        %s316 = scalar_lea.vmem %s2, %s315
        %p317 = pneg %p100
        %p318 = pneg %p97
        %s319 = sand.u32 %s115, 1
        %s320 = scalar_lea.sflag [#allocation4], %s319
        %s321 = sand.u32 %s115, 1
        %s322 = smul.addr %s321, 384
        %s323 = scalar_lea.vmem [#allocation3], %s322
        %p324 = pneg %p128
        %p325 = pneg %p125
        %p326 = scmp.lt.s32.totalorder %s24, 1
        %s327 = scalar_select %p326, %s24, 1
        %p328 = scmp.lt.s32.totalorder %s25, 1
        %s329 = scalar_select %p328, %s25, 1
        %s330 = smul.addr %s329, 2
        %s331 = smul.addr %s327, 4
        %s332 = sadd.s32 %s330, %s331
        %s333 = smul.addr %s332, 8
        %s334 = scalar_lea.vmem %s4, %s333
        %p335 = pneg %p156
        %p336 = pneg %p153
        %p337 = scmp.lt.s32.totalorder %s24, 1
        %s338 = scalar_select %p337, %s24, 1
        %s339 = smul.addr %s338, 16
        %s340 = smul.addr %s339, 4
        %s341 = scalar_lea.vmem %s5, %s340
        %p342 = pneg %p182
        %p343 = pneg %p179
        %p344 = pneg %p208
        %p345 = pneg %p205
        %p346 = scmp.lt.s32.totalorder %s24, 1
        %s347 = scalar_select %p346, %s24, 1
        %s348 = smul.addr %s347, 2
        %s349 = smul.addr %s348, 8
        %s350 = scalar_lea.vmem %s6, %s349
        %p351 = scmp.lt.s32.totalorder %s24, 1
        %s352 = scalar_select %p351, %s24, 1
        %s353 = smul.addr %s352, 2
        %s354 = smul.addr %s353, 8
        %s355 = scalar_lea.vmem %s0, %s354
        %p356 = scmp.lt.s32.totalorder %s24, 1
        %s357 = scalar_select %p356, %s24, 1
        %s358 = smul.addr %s357, 8
        %s359 = scalar_lea.vmem %s2, %s358
        %p360 = scmp.lt.s32.totalorder %s24, 1
        %s361 = scalar_select %p360, %s24, 1
        %p362 = scmp.lt.s32.totalorder %s25, 1
        %s363 = scalar_select %p362, %s25, 1
        %s364 = smul.addr %s363, 2
        %s365 = smul.addr %s361, 4
        %s366 = sadd.s32 %s364, %s365
        %s367 = smul.addr %s366, 8
        %s368 = scalar_lea.vmem %s4, %s367
        %p369 = scmp.lt.s32.totalorder %s24, 1
        %s370 = scalar_select %p369, %s24, 1
        %s371 = smul.addr %s370, 16
        %s372 = smul.addr %s371, 4
        %s373 = scalar_lea.vmem %s5, %s372
        %p374 = scmp.lt.s32.totalorder %s24, 1
        %s375 = scalar_select %p374, %s24, 1
        %s376 = smul.addr %s375, 2
        %s377 = smul.addr %s376, 8
        %s378 = scalar_lea.vmem %s6, %s377
        %p380 = scmp.eq.s32.totalorder %s24, 0
        %s381 = scalar_select %p380, 2, 1
        %v382 = vlaneseq
        %v383 = vand.u32 %v382, 127
        %vm384 = vcmp.lt.s32.totalorder %v383, 32
        %v385 = vsel %vm384, 1, 0
        %v386 = vcvt.s32.f32 %v385
        %p387 = scmp.eq.s32.totalorder %s25, 0
        // Predicated region
        $region49: #{distilbert_student_forward.1} parent=43 // pred_check
          %p388 = pneg %p387
        $region50: #{distilbert_student_forward.1} parent=43 // pred_check_branch
          %390 = sbr.rel (%p388) target = $region52
        $region51: #{distilbert_student_forward.1} parent=43 // pred_region
          %v391 = vld [vmem:[%s355] sm:$0xff]
          %v392 = vld [vmem:[%s355 + $0x8] sm:$0xff]
          %v393 = vld [vmem:[%s359] sm:$0x1]
          %v394 = vld [vmem:[%s359 + $0x1] sm:$0x1]
          %v395 = vmul.f32 %v391, %v386
          %v396 = vmul.f32 %v392, %v386
          %397 = vadd.xlane.f32.xlu0 %v395
          %v398 = vpop.xlane.xlu0 %397
          %399 = vadd.xlane.f32.xlu0 %v396
          %v400 = vpop.xlane.xlu0 %399
          %v401 = vmul.f32 %v398, 0.03125
          %v402 = vmul.f32 %v400, 0.03125
          %v403 = vsub.f32 %v391, %v401
          %v404 = vsub.f32 %v392, %v402
          %v405 = vmul.f32 %v403, %v386
          %v406 = vmul.f32 %v404, %v386
          %v407 = vmul.f32 %v405, %v405
          %v408 = vmul.f32 %v406, %v406
          %409 = vadd.xlane.f32.xlu0 %v407
          %v410 = vpop.xlane.xlu0 %409
          %411 = vadd.xlane.f32.xlu0 %v408
          %v412 = vpop.xlane.xlu0 %411
          %v413 = vmul.f32 %v410, 0.03125
          %v414 = vmul.f32 %v412, 0.03125
          %v415 = vadd.f32 %v413, 1e-12
          %v416 = vadd.f32 %v414, 1e-12
          %v417 = vrsqrt.pop %v415
          %v418 = vrsqrt.pop %v416
          %v419 = vmul.f32 %v405, %v417
          %v420 = vmul.f32 %v406, %v418
          %v421 = vlaneseq
          %v422 = vshrl.u32 %v421, 7
          %v423 = vsub.s32 0, %v422
          %v424 = vrot.slane %v393, %v423
          %v425 = vmul.f32 %v419, %v424
          %v426 = vmul.f32 %v420, %v424
          %v427 = vlaneseq
          %v428 = vshrl.u32 %v427, 7
          %v429 = vsub.s32 0, %v428
          %v430 = vrot.slane %v394, %v429
          %v431 = vadd.f32 %v425, %v430
          %v432 = vadd.f32 %v426, %v430
          %433 = vst [vmem:[#allocation2] sm:$0xff] %v431
          %434 = vst [vmem:[#allocation2 + $0x8] sm:$0xff] %v432
        $region52: #{distilbert_student_forward.1} parent=43 // pred_fallthru
          _
        %p435 = scmp.lt.s32.totalorder %s25, %s381
        // Predicated region
        $region53: #{distilbert_student_forward.1} parent=43 // pred_check
          %p436 = pneg %p435
        $region54: #{distilbert_student_forward.1} parent=43 // pred_check_branch
          %438 = sbr.rel (%p436) target = $region56
        $region55: #{distilbert_student_forward.1} parent=43 // pred_region
          %v439 = vld [vmem:[#allocation2] sm:$0xff]
          %v440 = vld [vmem:[#allocation2 + $0x8] sm:$0xff]
          %v441 = vpack.c.bf16 %v440, %v439
          %v442 = vld [vmem:[%s299] sm:$0xf]
          %v443 = vld [vmem:[%s299 + $0x4] sm:$0xf]
          %v444 = vld [vmem:[%s299 + $0x8] sm:$0xf]
          %v445 = vld [vmem:[%s299 + $0xc] sm:$0xf]
          %v446 = vld [vmem:[%s299 + $0x10] sm:$0xf]
          %v447 = vld [vmem:[%s299 + $0x14] sm:$0xf]
          %v448 = vld [vmem:[%s299 + $0x18] sm:$0xf]
          %v449 = vld [vmem:[%s299 + $0x1c] sm:$0xf]
          %v450 = vld [vmem:[%s299 + $0x20] sm:$0xf]
          %v451 = vld [vmem:[%s299 + $0x24] sm:$0xf]
          %v452 = vld [vmem:[%s299 + $0x28] sm:$0xf]
          %v453 = vld [vmem:[%s299 + $0x2c] sm:$0xf]
          %v454 = vld [vmem:[%s299 + $0x30] sm:$0xf]
          %v455 = vld [vmem:[%s299 + $0x34] sm:$0xf]
          %v456 = vld [vmem:[%s299 + $0x38] sm:$0xf]
          %v457 = vld [vmem:[%s299 + $0x3c] sm:$0xf]
          %v458 = vld [vmem:[%s368] sm:$0x1]
          %v459 = vlaneseq
          %v460 = vshrl.u32 %v459, 7
          %v461 = vsub.s32 0, %v460
          %v462 = vrot.slane %v458, %v461
          %v479 = vunpack.c.l.b16 %v442
          %v480 = vunpack.c.l.b16 %v443
          %v481 = vunpack.c.l.b16 %v444
          %v482 = vunpack.c.l.b16 %v445
          %v483 = vunpack.c.l.b16 %v446
          %v484 = vunpack.c.l.b16 %v447
          %v485 = vunpack.c.l.b16 %v448
          %v486 = vunpack.c.l.b16 %v449
          %v487 = vunpack.c.l.b16 %v450
          %v488 = vunpack.c.l.b16 %v451
          %v489 = vunpack.c.l.b16 %v452
          %v490 = vunpack.c.l.b16 %v453
          %v491 = vunpack.c.l.b16 %v454
          %v492 = vunpack.c.l.b16 %v455
          %v493 = vunpack.c.l.b16 %v456
          %v494 = vunpack.c.l.b16 %v457
          %v495 = vpack.c.b16 %v480, %v479
          %v496 = vpack.c.b16 %v482, %v481
          %v497 = vpack.c.b16 %v484, %v483
          %v498 = vpack.c.b16 %v486, %v485
          %v499 = vpack.c.b16 %v488, %v487
          %v500 = vpack.c.b16 %v490, %v489
          %v501 = vpack.c.b16 %v492, %v491
          %v502 = vpack.c.b16 %v494, %v493
          %511 = vmatprep.subr.bf16.mxu0 0
          %512 = vmatpush1.bf16.msra.mxu0 %v502
          %513 = vmatprep.subr.bf16.mxu0 0
          %514 = vmatpush1.bf16.msra.mxu0 %v501
          %515 = vmatprep.subr.bf16.mxu0 0
          %516 = vmatpush1.bf16.msra.mxu0 %v500
          %517 = vmatprep.subr.bf16.mxu0 0
          %518 = vmatpush1.bf16.msra.mxu0 %v499
          %519 = vmatprep.subr.bf16.mxu0 0
          %520 = vmatpush1.bf16.msra.mxu0 %v498
          %521 = vmatprep.subr.bf16.mxu0 0
          %522 = vmatpush1.bf16.msra.mxu0 %v497
          %523 = vmatprep.subr.bf16.mxu0 0
          %524 = vmatpush1.bf16.msra.mxu0 %v496
          %525 = vmatprep.subr.bf16.mxu0 0
          %526 = vmatpush1.bf16.msra.mxu0 %v495
          %527 = vmatprep.subr.bf16.mxu0 0
          %528 = vmatpush2.bf16.msra.mxu0 0
          %529 = vmatprep.subr.bf16.mxu0 0
          %530 = vmatpush2.bf16.msra.mxu0 0
          %531 = vmatprep.subr.bf16.mxu0 0
          %532 = vmatpush2.bf16.msra.mxu0 0
          %533 = vmatprep.subr.bf16.mxu0 0
          %534 = vmatpush2.bf16.msra.mxu0 0
          %535 = vmatprep.subr.bf16.mxu0 0
          %536 = vmatpush2.bf16.msra.mxu0 0
          %537 = vmatprep.subr.bf16.mxu0 0
          %538 = vmatpush2.bf16.msra.mxu0 0
          %539 = vmatprep.subr.bf16.mxu0 0
          %540 = vmatpush2.bf16.msra.mxu0 0
          %541 = vmatprep.subr.bf16.mxu0 0
          %542 = vmatpush2.bf16.msra.mxu0 0
          %543 = vmatprep.mubr.bf16.mxu0 0
          %544 = vmatmul.mubr.bf16.gmra.mxu0 %v441
          %v545 = vpop.f32.mrf.mxu0
          %v546 = vadd.f32 %v462, %v545
          %v547 = vpop.f32.mrf.mxu0
          %v548 = vpop.f32.mrf.mxu0
          %v549 = vadd.f32 %v462, %v548
          %v550 = vpop.f32.mrf.mxu0
          %551 = vdwg.mxu0
          %s552 = scalar_lea.vmem %s299, 64 [#allocation3]
          %v553 = vld [vmem:[%s552] sm:$0xf]
          %v554 = vld [vmem:[%s552 + $0x4] sm:$0xf]
          %v555 = vld [vmem:[%s552 + $0x8] sm:$0xf]
          %v556 = vld [vmem:[%s552 + $0xc] sm:$0xf]
          %v557 = vld [vmem:[%s552 + $0x10] sm:$0xf]
          %v558 = vld [vmem:[%s552 + $0x14] sm:$0xf]
          %v559 = vld [vmem:[%s552 + $0x18] sm:$0xf]
          %v560 = vld [vmem:[%s552 + $0x1c] sm:$0xf]
          %v561 = vld [vmem:[%s552 + $0x20] sm:$0xf]
          %v562 = vld [vmem:[%s552 + $0x24] sm:$0xf]
          %v563 = vld [vmem:[%s552 + $0x28] sm:$0xf]
          %v564 = vld [vmem:[%s552 + $0x2c] sm:$0xf]
          %v565 = vld [vmem:[%s552 + $0x30] sm:$0xf]
          %v566 = vld [vmem:[%s552 + $0x34] sm:$0xf]
          %v567 = vld [vmem:[%s552 + $0x38] sm:$0xf]
          %v568 = vld [vmem:[%s552 + $0x3c] sm:$0xf]
          %v569 = vld [vmem:[%s368 + $0x1] sm:$0x1]
          %v570 = vlaneseq
          %v571 = vshrl.u32 %v570, 7
          %v572 = vsub.s32 0, %v571
          %v573 = vrot.slane %v569, %v572
          %v590 = vunpack.c.l.b16 %v553
          %v591 = vunpack.c.l.b16 %v554
          %v592 = vunpack.c.l.b16 %v555
          %v593 = vunpack.c.l.b16 %v556
          %v594 = vunpack.c.l.b16 %v557
          %v595 = vunpack.c.l.b16 %v558
          %v596 = vunpack.c.l.b16 %v559
          %v597 = vunpack.c.l.b16 %v560
          %v598 = vunpack.c.l.b16 %v561
          %v599 = vunpack.c.l.b16 %v562
          %v600 = vunpack.c.l.b16 %v563
          %v601 = vunpack.c.l.b16 %v564
          %v602 = vunpack.c.l.b16 %v565
          %v603 = vunpack.c.l.b16 %v566
          %v604 = vunpack.c.l.b16 %v567
          %v605 = vunpack.c.l.b16 %v568
          %v606 = vpack.c.b16 %v591, %v590
          %v607 = vpack.c.b16 %v593, %v592
          %v608 = vpack.c.b16 %v595, %v594
          %v609 = vpack.c.b16 %v597, %v596
          %v610 = vpack.c.b16 %v599, %v598
          %v611 = vpack.c.b16 %v601, %v600
          %v612 = vpack.c.b16 %v603, %v602
          %v613 = vpack.c.b16 %v605, %v604
          %622 = vmatprep.subr.bf16.mxu0 0
          %623 = vmatpush1.bf16.msra.mxu0 %v613
          %624 = vmatprep.subr.bf16.mxu0 0
          %625 = vmatpush1.bf16.msra.mxu0 %v612
          %626 = vmatprep.subr.bf16.mxu0 0
          %627 = vmatpush1.bf16.msra.mxu0 %v611
          %628 = vmatprep.subr.bf16.mxu0 0
          %629 = vmatpush1.bf16.msra.mxu0 %v610
          %630 = vmatprep.subr.bf16.mxu0 0
          %631 = vmatpush1.bf16.msra.mxu0 %v609
          %632 = vmatprep.subr.bf16.mxu0 0
          %633 = vmatpush1.bf16.msra.mxu0 %v608
          %634 = vmatprep.subr.bf16.mxu0 0
          %635 = vmatpush1.bf16.msra.mxu0 %v607
          %636 = vmatprep.subr.bf16.mxu0 0
          %637 = vmatpush1.bf16.msra.mxu0 %v606
          %638 = vmatprep.subr.bf16.mxu0 0
          %639 = vmatpush2.bf16.msra.mxu0 0
          %640 = vmatprep.subr.bf16.mxu0 0
          %641 = vmatpush2.bf16.msra.mxu0 0
          %642 = vmatprep.subr.bf16.mxu0 0
          %643 = vmatpush2.bf16.msra.mxu0 0
          %644 = vmatprep.subr.bf16.mxu0 0
          %645 = vmatpush2.bf16.msra.mxu0 0
          %646 = vmatprep.subr.bf16.mxu0 0
          %647 = vmatpush2.bf16.msra.mxu0 0
          %648 = vmatprep.subr.bf16.mxu0 0
          %649 = vmatpush2.bf16.msra.mxu0 0
          %650 = vmatprep.subr.bf16.mxu0 0
          %651 = vmatpush2.bf16.msra.mxu0 0
          %652 = vmatprep.subr.bf16.mxu0 0
          %653 = vmatpush2.bf16.msra.mxu0 0
          %654 = vmatprep.mubr.bf16.mxu0 0
          %655 = vmatmul.mubr.bf16.gmra.mxu0 %v441
          %v656 = vpop.f32.mrf.mxu0
          %v657 = vadd.f32 %v573, %v656
          %v658 = vpop.f32.mrf.mxu0
          %v659 = vpop.f32.mrf.mxu0
          %v660 = vadd.f32 %v573, %v659
          %v661 = vpop.f32.mrf.mxu0
          %662 = vdwg.mxu0
          %s663 = scalar_lea.vmem %s299, 128 [#allocation3]
          %v664 = vld [vmem:[%s663] sm:$0xf]
          %v665 = vld [vmem:[%s663 + $0x4] sm:$0xf]
          %v666 = vld [vmem:[%s663 + $0x8] sm:$0xf]
          %v667 = vld [vmem:[%s663 + $0xc] sm:$0xf]
          %v668 = vld [vmem:[%s663 + $0x10] sm:$0xf]
          %v669 = vld [vmem:[%s663 + $0x14] sm:$0xf]
          %v670 = vld [vmem:[%s663 + $0x18] sm:$0xf]
          %v671 = vld [vmem:[%s663 + $0x1c] sm:$0xf]
          %v672 = vld [vmem:[%s663 + $0x20] sm:$0xf]
          %v673 = vld [vmem:[%s663 + $0x24] sm:$0xf]
          %v674 = vld [vmem:[%s663 + $0x28] sm:$0xf]
          %v675 = vld [vmem:[%s663 + $0x2c] sm:$0xf]
          %v676 = vld [vmem:[%s663 + $0x30] sm:$0xf]
          %v677 = vld [vmem:[%s663 + $0x34] sm:$0xf]
          %v678 = vld [vmem:[%s663 + $0x38] sm:$0xf]
          %v679 = vld [vmem:[%s663 + $0x3c] sm:$0xf]
          %v680 = vld [vmem:[%s368 + $0x2] sm:$0x1]
          %v681 = vlaneseq
          %v682 = vshrl.u32 %v681, 7
          %v683 = vsub.s32 0, %v682
          %v684 = vrot.slane %v680, %v683
          %v701 = vunpack.c.l.b16 %v664
          %v702 = vunpack.c.l.b16 %v665
          %v703 = vunpack.c.l.b16 %v666
          %v704 = vunpack.c.l.b16 %v667
          %v705 = vunpack.c.l.b16 %v668
          %v706 = vunpack.c.l.b16 %v669
          %v707 = vunpack.c.l.b16 %v670
          %v708 = vunpack.c.l.b16 %v671
          %v709 = vunpack.c.l.b16 %v672
          %v710 = vunpack.c.l.b16 %v673
          %v711 = vunpack.c.l.b16 %v674
          %v712 = vunpack.c.l.b16 %v675
          %v713 = vunpack.c.l.b16 %v676
          %v714 = vunpack.c.l.b16 %v677
          %v715 = vunpack.c.l.b16 %v678
          %v716 = vunpack.c.l.b16 %v679
          %v717 = vpack.c.b16 %v702, %v701
          %v718 = vpack.c.b16 %v704, %v703
          %v719 = vpack.c.b16 %v706, %v705
          %v720 = vpack.c.b16 %v708, %v707
          %v721 = vpack.c.b16 %v710, %v709
          %v722 = vpack.c.b16 %v712, %v711
          %v723 = vpack.c.b16 %v714, %v713
          %v724 = vpack.c.b16 %v716, %v715
          %733 = vmatprep.subr.bf16.mxu0 0
          %734 = vmatpush1.bf16.msra.mxu0 %v724
          %735 = vmatprep.subr.bf16.mxu0 0
          %736 = vmatpush1.bf16.msra.mxu0 %v723
          %737 = vmatprep.subr.bf16.mxu0 0
          %738 = vmatpush1.bf16.msra.mxu0 %v722
          %739 = vmatprep.subr.bf16.mxu0 0
          %740 = vmatpush1.bf16.msra.mxu0 %v721
          %741 = vmatprep.subr.bf16.mxu0 0
          %742 = vmatpush1.bf16.msra.mxu0 %v720
          %743 = vmatprep.subr.bf16.mxu0 0
          %744 = vmatpush1.bf16.msra.mxu0 %v719
          %745 = vmatprep.subr.bf16.mxu0 0
          %746 = vmatpush1.bf16.msra.mxu0 %v718
          %747 = vmatprep.subr.bf16.mxu0 0
          %748 = vmatpush1.bf16.msra.mxu0 %v717
          %749 = vmatprep.subr.bf16.mxu0 0
          %750 = vmatpush2.bf16.msra.mxu0 0
          %751 = vmatprep.subr.bf16.mxu0 0
          %752 = vmatpush2.bf16.msra.mxu0 0
          %753 = vmatprep.subr.bf16.mxu0 0
          %754 = vmatpush2.bf16.msra.mxu0 0
          %755 = vmatprep.subr.bf16.mxu0 0
          %756 = vmatpush2.bf16.msra.mxu0 0
          %757 = vmatprep.subr.bf16.mxu0 0
          %758 = vmatpush2.bf16.msra.mxu0 0
          %759 = vmatprep.subr.bf16.mxu0 0
          %760 = vmatpush2.bf16.msra.mxu0 0
          %761 = vmatprep.subr.bf16.mxu0 0
          %762 = vmatpush2.bf16.msra.mxu0 0
          %763 = vmatprep.subr.bf16.mxu0 0
          %764 = vmatpush2.bf16.msra.mxu0 0
          %765 = vmatprep.mubr.bf16.mxu0 0
          %766 = vmatmul.mubr.bf16.gmra.mxu0 %v441
          %v767 = vpop.f32.mrf.mxu0
          %v768 = vadd.f32 %v684, %v767
          %v769 = vpop.f32.mrf.mxu0
          %v770 = vpop.f32.mrf.mxu0
          %v771 = vadd.f32 %v684, %v770
          %v772 = vpop.f32.mrf.mxu0
          %773 = vdwg.mxu0
          %vm774 = vcmp.ge.s32.totalorder %v383, 0
          %vm775 = vcmp.lt.s32.totalorder %v383, 8
          %vm776 = vmand %vm774, %vm775
          %v777 = vsel %vm776, 1, 0
          %v778 = vcvt.s32.f32 %v777
          %vm779 = vcmp.ge.s32.totalorder %v383, 8
          %vm780 = vcmp.lt.s32.totalorder %v383, 16
          %vm781 = vmand %vm779, %vm780
          %v782 = vsel %vm781, 1, 0
          %v783 = vcvt.s32.f32 %v782
          %vm784 = vcmp.ge.s32.totalorder %v383, 16
          %vm785 = vcmp.lt.s32.totalorder %v383, 24
          %vm786 = vmand %vm784, %vm785
          %v787 = vsel %vm786, 1, 0
          %v788 = vcvt.s32.f32 %v787
          %vm789 = vcmp.ge.s32.totalorder %v383, 24
          %vm790 = vmand %vm789, %vm384
          %v791 = vsel %vm790, 1, 0
          %v792 = vcvt.s32.f32 %v791
          %v793 = vmul.f32 %v546, %v778
          %v794 = vmul.f32 %v549, %v778
          %v795 = vmul.f32 %v546, %v783
          %v796 = vmul.f32 %v549, %v783
          %v797 = vmul.f32 %v546, %v788
          %v798 = vmul.f32 %v549, %v788
          %v799 = vmul.f32 %v546, %v792
          %v800 = vmul.f32 %v549, %v792
          %v801 = vld [vmem:[%s1] sm:$0xff]
          %v802 = vld [vmem:[%s1 + $0x8] sm:$0xff]
          %v803 = vld [vmem:[%s1 + $0x10] sm:$0xff]
          %v804 = vld [vmem:[%s1 + $0x18] sm:$0xff]
          %v805 = vld [vmem:[%s1 + $0x20] sm:$0xff]
          %v806 = vld [vmem:[%s1 + $0x28] sm:$0xff]
          %v807 = vld [vmem:[%s1 + $0x30] sm:$0xff]
          %v808 = vld [vmem:[%s1 + $0x38] sm:$0xff]
          %809 = vmatprep.subr.mxu0 0.0
          %810 = vmatpush1.xpose.msra.mxu0 0.0
          %811 = vmatprep.subr.mxu0 0.0
          %812 = vmatpush1.xpose.msra.mxu0 0.0
          %813 = vmatprep.subr.mxu0 0.0
          %814 = vmatpush1.xpose.msra.mxu0 0.0
          %815 = vmatprep.subr.mxu0 0.0
          %816 = vmatpush1.xpose.msra.mxu0 0.0
          %817 = vmatprep.subr.mxu0 0.0
          %818 = vmatpush1.xpose.msra.mxu0 0.0
          %819 = vmatprep.subr.mxu0 0.0
          %820 = vmatpush1.xpose.msra.mxu0 0.0
          %821 = vmatprep.subr.mxu0 0.0
          %822 = vmatpush1.xpose.msra.mxu0 0.0
          %823 = vmatprep.subr.mxu0 0.0
          %824 = vmatpush1.xpose.msra.mxu0 0.0
          %825 = vmatprep.subr.mxu0 0.0
          %826 = vmatpush1.xpose.msra.mxu0 0.0
          %827 = vmatprep.subr.mxu0 0.0
          %828 = vmatpush1.xpose.msra.mxu0 0.0
          %829 = vmatprep.subr.mxu0 0.0
          %830 = vmatpush1.xpose.msra.mxu0 0.0
          %831 = vmatprep.subr.mxu0 0.0
          %832 = vmatpush1.xpose.msra.mxu0 0.0
          %833 = vmatprep.subr.mxu0 0.0
          %834 = vmatpush1.xpose.msra.mxu0 0.0
          %835 = vmatprep.subr.mxu0 0.0
          %836 = vmatpush1.xpose.msra.mxu0 0.0
          %837 = vmatprep.subr.mxu0 0.0
          %838 = vmatpush1.xpose.msra.mxu0 %v660
          %839 = vmatprep.subr.mxu0 0.0
          %840 = vmatpush1.xpose.msra.mxu0 %v657
          %841 = vmatprep.subr.mxu0 0.0
          %842 = vmatpush2.xpose.msra.mxu0 0.0
          %843 = vmatprep.subr.mxu0 0.0
          %844 = vmatpush2.xpose.msra.mxu0 0.0
          %845 = vmatprep.subr.mxu0 0.0
          %846 = vmatpush2.xpose.msra.mxu0 0.0
          %847 = vmatprep.subr.mxu0 0.0
          %848 = vmatpush2.xpose.msra.mxu0 0.0
          %849 = vmatprep.subr.mxu0 0.0
          %850 = vmatpush2.xpose.msra.mxu0 0.0
          %851 = vmatprep.subr.mxu0 0.0
          %852 = vmatpush2.xpose.msra.mxu0 0.0
          %853 = vmatprep.subr.mxu0 0.0
          %854 = vmatpush2.xpose.msra.mxu0 0.0
          %855 = vmatprep.subr.mxu0 0.0
          %856 = vmatpush2.xpose.msra.mxu0 0.0
          %857 = vmatprep.subr.mxu0 0.0
          %858 = vmatpush2.xpose.msra.mxu0 0.0
          %859 = vmatprep.subr.mxu0 0.0
          %860 = vmatpush2.xpose.msra.mxu0 0.0
          %861 = vmatprep.subr.mxu0 0.0
          %862 = vmatpush2.xpose.msra.mxu0 0.0
          %863 = vmatprep.subr.mxu0 0.0
          %864 = vmatpush2.xpose.msra.mxu0 0.0
          %865 = vmatprep.subr.mxu0 0.0
          %866 = vmatpush2.xpose.msra.mxu0 0.0
          %867 = vmatprep.subr.mxu0 0.0
          %868 = vmatpush2.xpose.msra.mxu0 0.0
          %869 = vmatprep.subr.mxu0 0.0
          %870 = vmatpush2.xpose.msra.mxu0 0.0
          %871 = vmatprep.subr.mxu0 0.0
          %872 = vmatpush2.xpose.msra.mxu0 0.0
          %873 = vmatprep.mubr.f32.mxu0 0.0
          %874 = vmatmul.mubr.f32.gmra.mxu0 %v793
          %v875 = vpop.f32.mrf.mxu0
          %v876 = vadd.f32 %v801, %v875
          %v877 = vpop.f32.mrf.mxu0
          %878 = vmatprep.mubr.f32.mxu0 0.0
          %879 = vmatmul.mubr.f32.gmra.mxu0 %v794
          %v880 = vpop.f32.mrf.mxu0
          %v881 = vadd.f32 %v802, %v880
          %v882 = vpop.f32.mrf.mxu0
          %883 = vmatprep.mubr.f32.mxu0 0.0
          %884 = vmatmul.mubr.f32.gmra.mxu0 %v795
          %v885 = vpop.f32.mrf.mxu0
          %v886 = vadd.f32 %v803, %v885
          %v887 = vpop.f32.mrf.mxu0
          %888 = vmatprep.mubr.f32.mxu0 0.0
          %889 = vmatmul.mubr.f32.gmra.mxu0 %v796
          %v890 = vpop.f32.mrf.mxu0
          %v891 = vadd.f32 %v804, %v890
          %v892 = vpop.f32.mrf.mxu0
          %893 = vmatprep.mubr.f32.mxu0 0.0
          %894 = vmatmul.mubr.f32.gmra.mxu0 %v797
          %v895 = vpop.f32.mrf.mxu0
          %v896 = vadd.f32 %v805, %v895
          %v897 = vpop.f32.mrf.mxu0
          %898 = vmatprep.mubr.f32.mxu0 0.0
          %899 = vmatmul.mubr.f32.gmra.mxu0 %v798
          %v900 = vpop.f32.mrf.mxu0
          %v901 = vadd.f32 %v806, %v900
          %v902 = vpop.f32.mrf.mxu0
          %903 = vmatprep.mubr.f32.mxu0 0.0
          %904 = vmatmul.mubr.f32.gmra.mxu0 %v799
          %v905 = vpop.f32.mrf.mxu0
          %v906 = vadd.f32 %v807, %v905
          %v907 = vpop.f32.mrf.mxu0
          %908 = vmatprep.mubr.f32.mxu0 0.0
          %909 = vmatmul.mubr.f32.gmra.mxu0 %v800
          %v910 = vpop.f32.mrf.mxu0
          %v911 = vadd.f32 %v808, %v910
          %v912 = vpop.f32.mrf.mxu0
          %913 = vdwg.mxu0
          %vm914 = vcmask 130048
          %v915 = vsel %vm914, %v876, -inf
          %916 = vmax.xlane.f32.xlu0 %v915
          %v917 = vpop.xlane.xlu0 %916
          %v918 = vsel %vm914, %v881, -inf
          %919 = vmax.xlane.f32.xlu0 %v918
          %v920 = vpop.xlane.xlu0 %919
          %v921 = vsel %vm914, %v886, -inf
          %922 = vmax.xlane.f32.xlu0 %v921
          %v923 = vpop.xlane.xlu0 %922
          %v924 = vsel %vm914, %v891, -inf
          %925 = vmax.xlane.f32.xlu0 %v924
          %v926 = vpop.xlane.xlu0 %925
          %v927 = vsel %vm914, %v896, -inf
          %928 = vmax.xlane.f32.xlu0 %v927
          %v929 = vpop.xlane.xlu0 %928
          %v930 = vsel %vm914, %v901, -inf
          %931 = vmax.xlane.f32.xlu0 %v930
          %v932 = vpop.xlane.xlu0 %931
          %v933 = vsel %vm914, %v906, -inf
          %934 = vmax.xlane.f32.xlu0 %v933
          %v935 = vpop.xlane.xlu0 %934
          %v936 = vsel %vm914, %v911, -inf
          %937 = vmax.xlane.f32.xlu0 %v936
          %v938 = vpop.xlane.xlu0 %937
          %v939 = vsub.f32 %v876, %v917
          %v940 = vsub.f32 %v881, %v920
          %v941 = vsub.f32 %v886, %v923
          %v942 = vsub.f32 %v891, %v926
          %v943 = vsub.f32 %v896, %v929
          %v944 = vsub.f32 %v901, %v932
          %v945 = vsub.f32 %v906, %v935
          %v946 = vsub.f32 %v911, %v938
          %v947 = vmul.f32 %v939, 1.442695
          %v948 = vpow.pop %v947
          %v949 = vmul.f32 %v940, 1.442695
          %v950 = vpow.pop %v949
          %v951 = vmul.f32 %v941, 1.442695
          %v952 = vpow.pop %v951
          %v953 = vmul.f32 %v942, 1.442695
          %v954 = vpow.pop %v953
          %v955 = vmul.f32 %v943, 1.442695
          %v956 = vpow.pop %v955
          %v957 = vmul.f32 %v944, 1.442695
          %v958 = vpow.pop %v957
          %v959 = vmul.f32 %v945, 1.442695
          %v960 = vpow.pop %v959
          %v961 = vmul.f32 %v946, 1.442695
          %v962 = vpow.pop %v961
          %v963 = vsel %vm914, %v948, 0.0
          %964 = vadd.xlane.f32.xlu0 %v963
          %v965 = vpop.xlane.xlu0 %964
          %v966 = vsel %vm914, %v950, 0.0
          %967 = vadd.xlane.f32.xlu0 %v966
          %v968 = vpop.xlane.xlu0 %967
          %v969 = vsel %vm914, %v952, 0.0
          %970 = vadd.xlane.f32.xlu0 %v969
          %v971 = vpop.xlane.xlu0 %970
          %v972 = vsel %vm914, %v954, 0.0
          %973 = vadd.xlane.f32.xlu0 %v972
          %v974 = vpop.xlane.xlu0 %973
          %v975 = vsel %vm914, %v956, 0.0
          %976 = vadd.xlane.f32.xlu0 %v975
          %v977 = vpop.xlane.xlu0 %976
          %v978 = vsel %vm914, %v958, 0.0
          %979 = vadd.xlane.f32.xlu0 %v978
          %v980 = vpop.xlane.xlu0 %979
          %v981 = vsel %vm914, %v960, 0.0
          %982 = vadd.xlane.f32.xlu0 %v981
          %v983 = vpop.xlane.xlu0 %982
          %v984 = vsel %vm914, %v962, 0.0
          %985 = vadd.xlane.f32.xlu0 %v984
          %v986 = vpop.xlane.xlu0 %985
          %v987 = vrcp.pop %v965
          %v988 = vrcp.pop %v968
          %v989 = vrcp.pop %v971
          %v990 = vrcp.pop %v974
          %v991 = vrcp.pop %v977
          %v992 = vrcp.pop %v980
          %v993 = vrcp.pop %v983
          %v994 = vrcp.pop %v986
          %v995 = vmul.f32 %v948, %v987
          %v996 = vmul.f32 %v950, %v988
          %v997 = vmul.f32 %v952, %v989
          %v998 = vmul.f32 %v954, %v990
          %v999 = vmul.f32 %v956, %v991
          %v1000 = vmul.f32 %v958, %v992
          %v1001 = vmul.f32 %v960, %v993
          %v1002 = vmul.f32 %v962, %v994
          %v1003 = vmul.f32 %v768, %v778
          %v1004 = vmul.f32 %v771, %v778
          %v1005 = vmul.f32 %v768, %v783
          %v1006 = vmul.f32 %v771, %v783
          %v1008 = vsel %vm914, %v997, 0
          %v1011 = vsel %vm914, %v998, 0
          %1013 = vmatprep.subr.mxu0 0.0
          %1014 = vmatpush1.msra.mxu0 0.0
          %1015 = vmatprep.subr.mxu0 0.0
          %1016 = vmatpush1.msra.mxu0 0.0
          %1017 = vmatprep.subr.mxu0 0.0
          %1018 = vmatpush1.msra.mxu0 0.0
          %1019 = vmatprep.subr.mxu0 0.0
          %1020 = vmatpush1.msra.mxu0 0.0
          %1021 = vmatprep.subr.mxu0 0.0
          %1022 = vmatpush1.msra.mxu0 0.0
          %1023 = vmatprep.subr.mxu0 0.0
          %1024 = vmatpush1.msra.mxu0 0.0
          %1025 = vmatprep.subr.mxu0 0.0
          %1026 = vmatpush1.msra.mxu0 0.0
          %1027 = vmatprep.subr.mxu0 0.0
          %1028 = vmatpush1.msra.mxu0 0.0
          %1029 = vmatprep.subr.mxu0 0.0
          %1030 = vmatpush1.msra.mxu0 0.0
          %1031 = vmatprep.subr.mxu0 0.0
          %1032 = vmatpush1.msra.mxu0 0.0
          %1033 = vmatprep.subr.mxu0 0.0
          %1034 = vmatpush1.msra.mxu0 0.0
          %1035 = vmatprep.subr.mxu0 0.0
          %1036 = vmatpush1.msra.mxu0 0.0
          %1037 = vmatprep.subr.mxu0 0.0
          %1038 = vmatpush1.msra.mxu0 0.0
          %1039 = vmatprep.subr.mxu0 0.0
          %1040 = vmatpush1.msra.mxu0 0.0
          %1041 = vmatprep.subr.mxu0 0.0
          %1042 = vmatpush1.msra.mxu0 %v1006
          %1043 = vmatprep.subr.mxu0 0.0
          %1044 = vmatpush1.msra.mxu0 %v1005
          %1045 = vmatprep.subr.mxu0 0.0
          %1046 = vmatpush2.msra.mxu0 0.0
          %1047 = vmatprep.subr.mxu0 0.0
          %1048 = vmatpush2.msra.mxu0 0.0
          %1049 = vmatprep.subr.mxu0 0.0
          %1050 = vmatpush2.msra.mxu0 0.0
          %1051 = vmatprep.subr.mxu0 0.0
          %1052 = vmatpush2.msra.mxu0 0.0
          %1053 = vmatprep.subr.mxu0 0.0
          %1054 = vmatpush2.msra.mxu0 0.0
          %1055 = vmatprep.subr.mxu0 0.0
          %1056 = vmatpush2.msra.mxu0 0.0
          %1057 = vmatprep.subr.mxu0 0.0
          %1058 = vmatpush2.msra.mxu0 0.0
          %1059 = vmatprep.subr.mxu0 0.0
          %1060 = vmatpush2.msra.mxu0 0.0
          %1061 = vmatprep.subr.mxu0 0.0
          %1062 = vmatpush2.msra.mxu0 0.0
          %1063 = vmatprep.subr.mxu0 0.0
          %1064 = vmatpush2.msra.mxu0 0.0
          %1065 = vmatprep.subr.mxu0 0.0
          %1066 = vmatpush2.msra.mxu0 0.0
          %1067 = vmatprep.subr.mxu0 0.0
          %1068 = vmatpush2.msra.mxu0 0.0
          %1069 = vmatprep.subr.mxu0 0.0
          %1070 = vmatpush2.msra.mxu0 0.0
          %1071 = vmatprep.subr.mxu0 0.0
          %1072 = vmatpush2.msra.mxu0 0.0
          %1073 = vmatprep.subr.mxu0 0.0
          %1074 = vmatpush2.msra.mxu0 0.0
          %1075 = vmatprep.subr.mxu0 0.0
          %1076 = vmatpush2.msra.mxu0 0.0
          %1077 = vmatprep.mubr.f32.mxu0 0.0
          %1078 = vmatmul.mubr.f32.gmra.mxu0 %v1008
          %v1079 = vpop.f32.mrf.mxu0
          %v1080 = vadd.f32 0.0, %v1079
          %v1081 = vpop.f32.mrf.mxu0
          %1082 = vmatprep.mubr.f32.mxu0 0.0
          %1083 = vmatmul.mubr.f32.gmra.mxu0 %v1011
          %v1084 = vpop.f32.mrf.mxu0
          %v1085 = vadd.f32 0.0, %v1084
          %v1086 = vpop.f32.mrf.mxu0
          %1087 = vdwg.mxu0
          %v1089 = vsel %vm914, %v995, 0
          %v1092 = vsel %vm914, %v996, 0
          %1094 = vmatprep.subr.mxu0 0.0
          %1095 = vmatpush1.msra.mxu0 0.0
          %1096 = vmatprep.subr.mxu0 0.0
          %1097 = vmatpush1.msra.mxu0 0.0
          %1098 = vmatprep.subr.mxu0 0.0
          %1099 = vmatpush1.msra.mxu0 0.0
          %1100 = vmatprep.subr.mxu0 0.0
          %1101 = vmatpush1.msra.mxu0 0.0
          %1102 = vmatprep.subr.mxu0 0.0
          %1103 = vmatpush1.msra.mxu0 0.0
          %1104 = vmatprep.subr.mxu0 0.0
          %1105 = vmatpush1.msra.mxu0 0.0
          %1106 = vmatprep.subr.mxu0 0.0
          %1107 = vmatpush1.msra.mxu0 0.0
          %1108 = vmatprep.subr.mxu0 0.0
          %1109 = vmatpush1.msra.mxu0 0.0
          %1110 = vmatprep.subr.mxu0 0.0
          %1111 = vmatpush1.msra.mxu0 0.0
          %1112 = vmatprep.subr.mxu0 0.0
          %1113 = vmatpush1.msra.mxu0 0.0
          %1114 = vmatprep.subr.mxu0 0.0
          %1115 = vmatpush1.msra.mxu0 0.0
          %1116 = vmatprep.subr.mxu0 0.0
          %1117 = vmatpush1.msra.mxu0 0.0
          %1118 = vmatprep.subr.mxu0 0.0
          %1119 = vmatpush1.msra.mxu0 0.0
          %1120 = vmatprep.subr.mxu0 0.0
          %1121 = vmatpush1.msra.mxu0 0.0
          %1122 = vmatprep.subr.mxu0 0.0
          %1123 = vmatpush1.msra.mxu0 %v1004
          %1124 = vmatprep.subr.mxu0 0.0
          %1125 = vmatpush1.msra.mxu0 %v1003
          %1126 = vmatprep.subr.mxu0 0.0
          %1127 = vmatpush2.msra.mxu0 0.0
          %1128 = vmatprep.subr.mxu0 0.0
          %1129 = vmatpush2.msra.mxu0 0.0
          %1130 = vmatprep.subr.mxu0 0.0
          %1131 = vmatpush2.msra.mxu0 0.0
          %1132 = vmatprep.subr.mxu0 0.0
          %1133 = vmatpush2.msra.mxu0 0.0
          %1134 = vmatprep.subr.mxu0 0.0
          %1135 = vmatpush2.msra.mxu0 0.0
          %1136 = vmatprep.subr.mxu0 0.0
          %1137 = vmatpush2.msra.mxu0 0.0
          %1138 = vmatprep.subr.mxu0 0.0
          %1139 = vmatpush2.msra.mxu0 0.0
          %1140 = vmatprep.subr.mxu0 0.0
          %1141 = vmatpush2.msra.mxu0 0.0
          %1142 = vmatprep.subr.mxu0 0.0
          %1143 = vmatpush2.msra.mxu0 0.0
          %1144 = vmatprep.subr.mxu0 0.0
          %1145 = vmatpush2.msra.mxu0 0.0
          %1146 = vmatprep.subr.mxu0 0.0
          %1147 = vmatpush2.msra.mxu0 0.0
          %1148 = vmatprep.subr.mxu0 0.0
          %1149 = vmatpush2.msra.mxu0 0.0
          %1150 = vmatprep.subr.mxu0 0.0
          %1151 = vmatpush2.msra.mxu0 0.0
          %1152 = vmatprep.subr.mxu0 0.0
          %1153 = vmatpush2.msra.mxu0 0.0
          %1154 = vmatprep.subr.mxu0 0.0
          %1155 = vmatpush2.msra.mxu0 0.0
          %1156 = vmatprep.subr.mxu0 0.0
          %1157 = vmatpush2.msra.mxu0 0.0
          %1158 = vmatprep.mubr.f32.mxu0 0.0
          %1159 = vmatmul.mubr.f32.gmra.mxu0 %v1089
          %v1160 = vpop.f32.mrf.mxu0
          %v1161 = vadd.f32 %v1080, %v1160
          %v1162 = vpop.f32.mrf.mxu0
          %1163 = vmatprep.mubr.f32.mxu0 0.0
          %1164 = vmatmul.mubr.f32.gmra.mxu0 %v1092
          %v1165 = vpop.f32.mrf.mxu0
          %v1166 = vadd.f32 %v1085, %v1165
          %v1167 = vpop.f32.mrf.mxu0
          %1168 = vdwg.mxu0
          %v1169 = vmul.f32 %v768, %v788
          %v1170 = vmul.f32 %v771, %v788
          %v1172 = vsel %vm914, %v999, 0
          %v1175 = vsel %vm914, %v1000, 0
          %1177 = vmatprep.subr.mxu0 0.0
          %1178 = vmatpush1.msra.mxu0 0.0
          %1179 = vmatprep.subr.mxu0 0.0
          %1180 = vmatpush1.msra.mxu0 0.0
          %1181 = vmatprep.subr.mxu0 0.0
          %1182 = vmatpush1.msra.mxu0 0.0
          %1183 = vmatprep.subr.mxu0 0.0
          %1184 = vmatpush1.msra.mxu0 0.0
          %1185 = vmatprep.subr.mxu0 0.0
          %1186 = vmatpush1.msra.mxu0 0.0
          %1187 = vmatprep.subr.mxu0 0.0
          %1188 = vmatpush1.msra.mxu0 0.0
          %1189 = vmatprep.subr.mxu0 0.0
          %1190 = vmatpush1.msra.mxu0 0.0
          %1191 = vmatprep.subr.mxu0 0.0
          %1192 = vmatpush1.msra.mxu0 0.0
          %1193 = vmatprep.subr.mxu0 0.0
          %1194 = vmatpush1.msra.mxu0 0.0
          %1195 = vmatprep.subr.mxu0 0.0
          %1196 = vmatpush1.msra.mxu0 0.0
          %1197 = vmatprep.subr.mxu0 0.0
          %1198 = vmatpush1.msra.mxu0 0.0
          %1199 = vmatprep.subr.mxu0 0.0
          %1200 = vmatpush1.msra.mxu0 0.0
          %1201 = vmatprep.subr.mxu0 0.0
          %1202 = vmatpush1.msra.mxu0 0.0
          %1203 = vmatprep.subr.mxu0 0.0
          %1204 = vmatpush1.msra.mxu0 0.0
          %1205 = vmatprep.subr.mxu0 0.0
          %1206 = vmatpush1.msra.mxu0 %v1170
          %1207 = vmatprep.subr.mxu0 0.0
          %1208 = vmatpush1.msra.mxu0 %v1169
          %1209 = vmatprep.subr.mxu0 0.0
          %1210 = vmatpush2.msra.mxu0 0.0
          %1211 = vmatprep.subr.mxu0 0.0
          %1212 = vmatpush2.msra.mxu0 0.0
          %1213 = vmatprep.subr.mxu0 0.0
          %1214 = vmatpush2.msra.mxu0 0.0
          %1215 = vmatprep.subr.mxu0 0.0
          %1216 = vmatpush2.msra.mxu0 0.0
          %1217 = vmatprep.subr.mxu0 0.0
          %1218 = vmatpush2.msra.mxu0 0.0
          %1219 = vmatprep.subr.mxu0 0.0
          %1220 = vmatpush2.msra.mxu0 0.0
          %1221 = vmatprep.subr.mxu0 0.0
          %1222 = vmatpush2.msra.mxu0 0.0
          %1223 = vmatprep.subr.mxu0 0.0
          %1224 = vmatpush2.msra.mxu0 0.0
          %1225 = vmatprep.subr.mxu0 0.0
          %1226 = vmatpush2.msra.mxu0 0.0
          %1227 = vmatprep.subr.mxu0 0.0
          %1228 = vmatpush2.msra.mxu0 0.0
          %1229 = vmatprep.subr.mxu0 0.0
          %1230 = vmatpush2.msra.mxu0 0.0
          %1231 = vmatprep.subr.mxu0 0.0
          %1232 = vmatpush2.msra.mxu0 0.0
          %1233 = vmatprep.subr.mxu0 0.0
          %1234 = vmatpush2.msra.mxu0 0.0
          %1235 = vmatprep.subr.mxu0 0.0
          %1236 = vmatpush2.msra.mxu0 0.0
          %1237 = vmatprep.subr.mxu0 0.0
          %1238 = vmatpush2.msra.mxu0 0.0
          %1239 = vmatprep.subr.mxu0 0.0
          %1240 = vmatpush2.msra.mxu0 0.0
          %1241 = vmatprep.mubr.f32.mxu0 0.0
          %1242 = vmatmul.mubr.f32.gmra.mxu0 %v1172
          %v1243 = vpop.f32.mrf.mxu0
          %v1244 = vadd.f32 0.0, %v1243
          %v1245 = vpop.f32.mrf.mxu0
          %1246 = vmatprep.mubr.f32.mxu0 0.0
          %1247 = vmatmul.mubr.f32.gmra.mxu0 %v1175
          %v1248 = vpop.f32.mrf.mxu0
          %v1249 = vadd.f32 0.0, %v1248
          %v1250 = vpop.f32.mrf.mxu0
          %1251 = vdwg.mxu0
          %v1252 = vadd.f32 %v1161, %v1244
          %v1253 = vadd.f32 %v1166, %v1249
          %v1254 = vmul.f32 %v768, %v792
          %v1255 = vmul.f32 %v771, %v792
          %v1257 = vsel %vm914, %v1001, 0
          %v1260 = vsel %vm914, %v1002, 0
          %1262 = vmatprep.subr.mxu0 0.0
          %1263 = vmatpush1.msra.mxu0 0.0
          %1264 = vmatprep.subr.mxu0 0.0
          %1265 = vmatpush1.msra.mxu0 0.0
          %1266 = vmatprep.subr.mxu0 0.0
          %1267 = vmatpush1.msra.mxu0 0.0
          %1268 = vmatprep.subr.mxu0 0.0
          %1269 = vmatpush1.msra.mxu0 0.0
          %1270 = vmatprep.subr.mxu0 0.0
          %1271 = vmatpush1.msra.mxu0 0.0
          %1272 = vmatprep.subr.mxu0 0.0
          %1273 = vmatpush1.msra.mxu0 0.0
          %1274 = vmatprep.subr.mxu0 0.0
          %1275 = vmatpush1.msra.mxu0 0.0
          %1276 = vmatprep.subr.mxu0 0.0
          %1277 = vmatpush1.msra.mxu0 0.0
          %1278 = vmatprep.subr.mxu0 0.0
          %1279 = vmatpush1.msra.mxu0 0.0
          %1280 = vmatprep.subr.mxu0 0.0
          %1281 = vmatpush1.msra.mxu0 0.0
          %1282 = vmatprep.subr.mxu0 0.0
          %1283 = vmatpush1.msra.mxu0 0.0
          %1284 = vmatprep.subr.mxu0 0.0
          %1285 = vmatpush1.msra.mxu0 0.0
          %1286 = vmatprep.subr.mxu0 0.0
          %1287 = vmatpush1.msra.mxu0 0.0
          %1288 = vmatprep.subr.mxu0 0.0
          %1289 = vmatpush1.msra.mxu0 0.0
          %1290 = vmatprep.subr.mxu0 0.0
          %1291 = vmatpush1.msra.mxu0 %v1255
          %1292 = vmatprep.subr.mxu0 0.0
          %1293 = vmatpush1.msra.mxu0 %v1254
          %1294 = vmatprep.subr.mxu0 0.0
          %1295 = vmatpush2.msra.mxu0 0.0
          %1296 = vmatprep.subr.mxu0 0.0
          %1297 = vmatpush2.msra.mxu0 0.0
          %1298 = vmatprep.subr.mxu0 0.0
          %1299 = vmatpush2.msra.mxu0 0.0
          %1300 = vmatprep.subr.mxu0 0.0
          %1301 = vmatpush2.msra.mxu0 0.0
          %1302 = vmatprep.subr.mxu0 0.0
          %1303 = vmatpush2.msra.mxu0 0.0
          %1304 = vmatprep.subr.mxu0 0.0
          %1305 = vmatpush2.msra.mxu0 0.0
          %1306 = vmatprep.subr.mxu0 0.0
          %1307 = vmatpush2.msra.mxu0 0.0
          %1308 = vmatprep.subr.mxu0 0.0
          %1309 = vmatpush2.msra.mxu0 0.0
          %1310 = vmatprep.subr.mxu0 0.0
          %1311 = vmatpush2.msra.mxu0 0.0
          %1312 = vmatprep.subr.mxu0 0.0
          %1313 = vmatpush2.msra.mxu0 0.0
          %1314 = vmatprep.subr.mxu0 0.0
          %1315 = vmatpush2.msra.mxu0 0.0
          %1316 = vmatprep.subr.mxu0 0.0
          %1317 = vmatpush2.msra.mxu0 0.0
          %1318 = vmatprep.subr.mxu0 0.0
          %1319 = vmatpush2.msra.mxu0 0.0
          %1320 = vmatprep.subr.mxu0 0.0
          %1321 = vmatpush2.msra.mxu0 0.0
          %1322 = vmatprep.subr.mxu0 0.0
          %1323 = vmatpush2.msra.mxu0 0.0
          %1324 = vmatprep.subr.mxu0 0.0
          %1325 = vmatpush2.msra.mxu0 0.0
          %1326 = vmatprep.mubr.f32.mxu0 0.0
          %1327 = vmatmul.mubr.f32.gmra.mxu0 %v1257
          %v1328 = vpop.f32.mrf.mxu0
          %v1329 = vadd.f32 0.0, %v1328
          %v1330 = vpop.f32.mrf.mxu0
          %1331 = vmatprep.mubr.f32.mxu0 0.0
          %1332 = vmatmul.mubr.f32.gmra.mxu0 %v1260
          %v1333 = vpop.f32.mrf.mxu0
          %v1334 = vadd.f32 0.0, %v1333
          %v1335 = vpop.f32.mrf.mxu0
          %1336 = vdwg.mxu0
          %v1337 = vadd.f32 %v1252, %v1329
          %v1338 = vadd.f32 %v1253, %v1334
          %v1339 = vpack.c.bf16 %v1338, %v1337
          %s1340 = scalar_lea.vmem %s299, 192 [#allocation3]
          %v1341 = vld [vmem:[%s1340] sm:$0xf]
          %v1342 = vld [vmem:[%s1340 + $0x4] sm:$0xf]
          %v1343 = vld [vmem:[%s1340 + $0x8] sm:$0xf]
          %v1344 = vld [vmem:[%s1340 + $0xc] sm:$0xf]
          %v1345 = vld [vmem:[%s1340 + $0x10] sm:$0xf]
          %v1346 = vld [vmem:[%s1340 + $0x14] sm:$0xf]
          %v1347 = vld [vmem:[%s1340 + $0x18] sm:$0xf]
          %v1348 = vld [vmem:[%s1340 + $0x1c] sm:$0xf]
          %v1349 = vld [vmem:[%s1340 + $0x20] sm:$0xf]
          %v1350 = vld [vmem:[%s1340 + $0x24] sm:$0xf]
          %v1351 = vld [vmem:[%s1340 + $0x28] sm:$0xf]
          %v1352 = vld [vmem:[%s1340 + $0x2c] sm:$0xf]
          %v1353 = vld [vmem:[%s1340 + $0x30] sm:$0xf]
          %v1354 = vld [vmem:[%s1340 + $0x34] sm:$0xf]
          %v1355 = vld [vmem:[%s1340 + $0x38] sm:$0xf]
          %v1356 = vld [vmem:[%s1340 + $0x3c] sm:$0xf]
          %v1357 = vld [vmem:[%s368 + $0x3] sm:$0x1]
          %v1358 = vlaneseq
          %v1359 = vshrl.u32 %v1358, 7
          %v1360 = vsub.s32 0, %v1359
          %v1361 = vrot.slane %v1357, %v1360
          %v1378 = vunpack.c.l.b16 %v1341
          %v1379 = vunpack.c.l.b16 %v1342
          %v1380 = vunpack.c.l.b16 %v1343
          %v1381 = vunpack.c.l.b16 %v1344
          %v1382 = vunpack.c.l.b16 %v1345
          %v1383 = vunpack.c.l.b16 %v1346
          %v1384 = vunpack.c.l.b16 %v1347
          %v1385 = vunpack.c.l.b16 %v1348
          %v1386 = vunpack.c.l.b16 %v1349
          %v1387 = vunpack.c.l.b16 %v1350
          %v1388 = vunpack.c.l.b16 %v1351
          %v1389 = vunpack.c.l.b16 %v1352
          %v1390 = vunpack.c.l.b16 %v1353
          %v1391 = vunpack.c.l.b16 %v1354
          %v1392 = vunpack.c.l.b16 %v1355
          %v1393 = vunpack.c.l.b16 %v1356
          %v1394 = vpack.c.b16 %v1379, %v1378
          %v1395 = vpack.c.b16 %v1381, %v1380
          %v1396 = vpack.c.b16 %v1383, %v1382
          %v1397 = vpack.c.b16 %v1385, %v1384
          %v1398 = vpack.c.b16 %v1387, %v1386
          %v1399 = vpack.c.b16 %v1389, %v1388
          %v1400 = vpack.c.b16 %v1391, %v1390
          %v1401 = vpack.c.b16 %v1393, %v1392
          %1410 = vmatprep.subr.bf16.mxu0 0
          %1411 = vmatpush1.bf16.msra.mxu0 %v1401
          %1412 = vmatprep.subr.bf16.mxu0 0
          %1413 = vmatpush1.bf16.msra.mxu0 %v1400
          %1414 = vmatprep.subr.bf16.mxu0 0
          %1415 = vmatpush1.bf16.msra.mxu0 %v1399
          %1416 = vmatprep.subr.bf16.mxu0 0
          %1417 = vmatpush1.bf16.msra.mxu0 %v1398
          %1418 = vmatprep.subr.bf16.mxu0 0
          %1419 = vmatpush1.bf16.msra.mxu0 %v1397
          %1420 = vmatprep.subr.bf16.mxu0 0
          %1421 = vmatpush1.bf16.msra.mxu0 %v1396
          %1422 = vmatprep.subr.bf16.mxu0 0
          %1423 = vmatpush1.bf16.msra.mxu0 %v1395
          %1424 = vmatprep.subr.bf16.mxu0 0
          %1425 = vmatpush1.bf16.msra.mxu0 %v1394
          %1426 = vmatprep.subr.bf16.mxu0 0
          %1427 = vmatpush2.bf16.msra.mxu0 0
          %1428 = vmatprep.subr.bf16.mxu0 0
          %1429 = vmatpush2.bf16.msra.mxu0 0
          %1430 = vmatprep.subr.bf16.mxu0 0
          %1431 = vmatpush2.bf16.msra.mxu0 0
          %1432 = vmatprep.subr.bf16.mxu0 0
          %1433 = vmatpush2.bf16.msra.mxu0 0
          %1434 = vmatprep.subr.bf16.mxu0 0
          %1435 = vmatpush2.bf16.msra.mxu0 0
          %1436 = vmatprep.subr.bf16.mxu0 0
          %1437 = vmatpush2.bf16.msra.mxu0 0
          %1438 = vmatprep.subr.bf16.mxu0 0
          %1439 = vmatpush2.bf16.msra.mxu0 0
          %1440 = vmatprep.subr.bf16.mxu0 0
          %1441 = vmatpush2.bf16.msra.mxu0 0
          %1442 = vmatprep.mubr.bf16.mxu0 0
          %1443 = vmatmul.mubr.bf16.gmra.mxu0 %v1339
          %v1444 = vpop.f32.mrf.mxu0
          %v1445 = vadd.f32 %v1361, %v1444
          %v1446 = vpop.f32.mrf.mxu0
          %v1447 = vpop.f32.mrf.mxu0
          %v1448 = vadd.f32 %v1361, %v1447
          %v1449 = vpop.f32.mrf.mxu0
          %1450 = vdwg.mxu0
          %v1451 = vadd.f32 %v439, %v1445
          %v1452 = vadd.f32 %v440, %v1448
          %v1453 = vld [vmem:[%s368 + $0x4] sm:$0x1]
          %v1454 = vld [vmem:[%s368 + $0x5] sm:$0x1]
          %v1455 = vmul.f32 %v1451, %v386
          %v1456 = vmul.f32 %v1452, %v386
          %1457 = vadd.xlane.f32.xlu0 %v1455
          %v1458 = vpop.xlane.xlu0 %1457
          %1459 = vadd.xlane.f32.xlu0 %v1456
          %v1460 = vpop.xlane.xlu0 %1459
          %v1461 = vmul.f32 %v1458, 0.03125
          %v1462 = vmul.f32 %v1460, 0.03125
          %v1463 = vsub.f32 %v1451, %v1461
          %v1464 = vsub.f32 %v1452, %v1462
          %v1465 = vmul.f32 %v1463, %v386
          %v1466 = vmul.f32 %v1464, %v386
          %v1467 = vmul.f32 %v1465, %v1465
          %v1468 = vmul.f32 %v1466, %v1466
          %1469 = vadd.xlane.f32.xlu0 %v1467
          %v1470 = vpop.xlane.xlu0 %1469
          %1471 = vadd.xlane.f32.xlu0 %v1468
          %v1472 = vpop.xlane.xlu0 %1471
          %v1473 = vmul.f32 %v1470, 0.03125
          %v1474 = vmul.f32 %v1472, 0.03125
          %v1475 = vadd.f32 %v1473, 1e-12
          %v1476 = vadd.f32 %v1474, 1e-12
          %v1477 = vrsqrt.pop %v1475
          %v1478 = vrsqrt.pop %v1476
          %v1479 = vmul.f32 %v1465, %v1477
          %v1480 = vmul.f32 %v1466, %v1478
          %v1481 = vlaneseq
          %v1482 = vshrl.u32 %v1481, 7
          %v1483 = vsub.s32 0, %v1482
          %v1484 = vrot.slane %v1453, %v1483
          %v1485 = vmul.f32 %v1479, %v1484
          %v1486 = vmul.f32 %v1480, %v1484
          %v1487 = vlaneseq
          %v1488 = vshrl.u32 %v1487, 7
          %v1489 = vsub.s32 0, %v1488
          %v1490 = vrot.slane %v1454, %v1489
          %v1491 = vadd.f32 %v1485, %v1490
          %v1492 = vadd.f32 %v1486, %v1490
          %v1493 = vpack.c.bf16 %v1492, %v1491
          %s1494 = scalar_lea.vmem %s299, 256 [#allocation3]
          %v1495 = vld [vmem:[%s1494] sm:$0xf]
          %v1496 = vld [vmem:[%s1494 + $0x4] sm:$0xf]
          %v1497 = vld [vmem:[%s1494 + $0x8] sm:$0xf]
          %v1498 = vld [vmem:[%s1494 + $0xc] sm:$0xf]
          %v1499 = vld [vmem:[%s1494 + $0x10] sm:$0xf]
          %v1500 = vld [vmem:[%s1494 + $0x14] sm:$0xf]
          %v1501 = vld [vmem:[%s1494 + $0x18] sm:$0xf]
          %v1502 = vld [vmem:[%s1494 + $0x1c] sm:$0xf]
          %v1503 = vld [vmem:[%s1494 + $0x20] sm:$0xf]
          %v1504 = vld [vmem:[%s1494 + $0x24] sm:$0xf]
          %v1505 = vld [vmem:[%s1494 + $0x28] sm:$0xf]
          %v1506 = vld [vmem:[%s1494 + $0x2c] sm:$0xf]
          %v1507 = vld [vmem:[%s1494 + $0x30] sm:$0xf]
          %v1508 = vld [vmem:[%s1494 + $0x34] sm:$0xf]
          %v1509 = vld [vmem:[%s1494 + $0x38] sm:$0xf]
          %v1510 = vld [vmem:[%s1494 + $0x3c] sm:$0xf]
          %v1511 = vld [vmem:[%s368 + $0x6] sm:$0x1]
          %v1512 = vlaneseq
          %v1513 = vshrl.u32 %v1512, 7
          %v1514 = vsub.s32 0, %v1513
          %v1515 = vrot.slane %v1511, %v1514
          %v1532 = vunpack.c.l.b16 %v1495
          %v1533 = vunpack.c.l.b16 %v1496
          %v1534 = vunpack.c.l.b16 %v1497
          %v1535 = vunpack.c.l.b16 %v1498
          %v1536 = vunpack.c.l.b16 %v1499
          %v1537 = vunpack.c.l.b16 %v1500
          %v1538 = vunpack.c.l.b16 %v1501
          %v1539 = vunpack.c.l.b16 %v1502
          %v1540 = vunpack.c.l.b16 %v1503
          %v1541 = vunpack.c.l.b16 %v1504
          %v1542 = vunpack.c.l.b16 %v1505
          %v1543 = vunpack.c.l.b16 %v1506
          %v1544 = vunpack.c.l.b16 %v1507
          %v1545 = vunpack.c.l.b16 %v1508
          %v1546 = vunpack.c.l.b16 %v1509
          %v1547 = vunpack.c.l.b16 %v1510
          %v1548 = vpack.c.b16 %v1533, %v1532
          %v1549 = vpack.c.b16 %v1535, %v1534
          %v1550 = vpack.c.b16 %v1537, %v1536
          %v1551 = vpack.c.b16 %v1539, %v1538
          %v1552 = vpack.c.b16 %v1541, %v1540
          %v1553 = vpack.c.b16 %v1543, %v1542
          %v1554 = vpack.c.b16 %v1545, %v1544
          %v1555 = vpack.c.b16 %v1547, %v1546
          %1564 = vmatprep.subr.bf16.mxu0 0
          %1565 = vmatpush1.bf16.msra.mxu0 %v1555
          %1566 = vmatprep.subr.bf16.mxu0 0
          %1567 = vmatpush1.bf16.msra.mxu0 %v1554
          %1568 = vmatprep.subr.bf16.mxu0 0
          %1569 = vmatpush1.bf16.msra.mxu0 %v1553
          %1570 = vmatprep.subr.bf16.mxu0 0
          %1571 = vmatpush1.bf16.msra.mxu0 %v1552
          %1572 = vmatprep.subr.bf16.mxu0 0
          %1573 = vmatpush1.bf16.msra.mxu0 %v1551
          %1574 = vmatprep.subr.bf16.mxu0 0
          %1575 = vmatpush1.bf16.msra.mxu0 %v1550
          %1576 = vmatprep.subr.bf16.mxu0 0
          %1577 = vmatpush1.bf16.msra.mxu0 %v1549
          %1578 = vmatprep.subr.bf16.mxu0 0
          %1579 = vmatpush1.bf16.msra.mxu0 %v1548
          %1580 = vmatprep.subr.bf16.mxu0 0
          %1581 = vmatpush2.bf16.msra.mxu0 0
          %1582 = vmatprep.subr.bf16.mxu0 0
          %1583 = vmatpush2.bf16.msra.mxu0 0
          %1584 = vmatprep.subr.bf16.mxu0 0
          %1585 = vmatpush2.bf16.msra.mxu0 0
          %1586 = vmatprep.subr.bf16.mxu0 0
          %1587 = vmatpush2.bf16.msra.mxu0 0
          %1588 = vmatprep.subr.bf16.mxu0 0
          %1589 = vmatpush2.bf16.msra.mxu0 0
          %1590 = vmatprep.subr.bf16.mxu0 0
          %1591 = vmatpush2.bf16.msra.mxu0 0
          %1592 = vmatprep.subr.bf16.mxu0 0
          %1593 = vmatpush2.bf16.msra.mxu0 0
          %1594 = vmatprep.subr.bf16.mxu0 0
          %1595 = vmatpush2.bf16.msra.mxu0 0
          %1596 = vmatprep.mubr.bf16.mxu0 0
          %1597 = vmatmul.mubr.bf16.gmra.mxu0 %v1493
          %v1598 = vpop.f32.mrf.mxu0
          %v1599 = vadd.f32 %v1515, %v1598
          %v1600 = vpop.f32.mrf.mxu0
          %v1601 = vpop.f32.mrf.mxu0
          %v1602 = vadd.f32 %v1515, %v1601
          %v1603 = vpop.f32.mrf.mxu0
          %1604 = vdwg.mxu0
          %v1605 = vmul.f32 %v1599, 0.5
          %v1606 = vmul.f32 %v1602, 0.5
          %v1607 = vmul.f32 %v1599, 0.044715
          %v1608 = vmul.f32 %v1602, 0.044715
          %v1609 = vmul.f32 %v1607, %v1599
          %v1610 = vmul.f32 %v1608, %v1602
          %v1611 = vmul.f32 %v1609, %v1599
          %v1612 = vmul.f32 %v1610, %v1602
          %v1613 = vadd.f32 %v1599, %v1611
          %v1614 = vadd.f32 %v1602, %v1612
          %v1615 = vmul.f32 %v1613, 0.7978846
          %v1616 = vmul.f32 %v1614, 0.7978846
          %v1617 = vtanh.pop %v1615
          %v1618 = vtanh.pop %v1616
          %v1619 = vadd.f32 %v1617, 1.0
          %v1620 = vadd.f32 %v1618, 1.0
          %v1621 = vmul.f32 %v1605, %v1619
          %v1622 = vmul.f32 %v1606, %v1620
          %v1623 = vpack.c.bf16 %v1622, %v1621
          %s1624 = scalar_lea.vmem %s299, 320 [#allocation3]
          %v1625 = vld [vmem:[%s1624] sm:$0xf]
          %v1626 = vld [vmem:[%s1624 + $0x4] sm:$0xf]
          %v1627 = vld [vmem:[%s1624 + $0x8] sm:$0xf]
          %v1628 = vld [vmem:[%s1624 + $0xc] sm:$0xf]
          %v1629 = vld [vmem:[%s1624 + $0x10] sm:$0xf]
          %v1630 = vld [vmem:[%s1624 + $0x14] sm:$0xf]
          %v1631 = vld [vmem:[%s1624 + $0x18] sm:$0xf]
          %v1632 = vld [vmem:[%s1624 + $0x1c] sm:$0xf]
          %v1633 = vld [vmem:[%s1624 + $0x20] sm:$0xf]
          %v1634 = vld [vmem:[%s1624 + $0x24] sm:$0xf]
          %v1635 = vld [vmem:[%s1624 + $0x28] sm:$0xf]
          %v1636 = vld [vmem:[%s1624 + $0x2c] sm:$0xf]
          %v1637 = vld [vmem:[%s1624 + $0x30] sm:$0xf]
          %v1638 = vld [vmem:[%s1624 + $0x34] sm:$0xf]
          %v1639 = vld [vmem:[%s1624 + $0x38] sm:$0xf]
          %v1640 = vld [vmem:[%s1624 + $0x3c] sm:$0xf]
          %v1641 = vld [vmem:[%s368 + $0x7] sm:$0x1]
          %v1642 = vlaneseq
          %v1643 = vshrl.u32 %v1642, 7
          %v1644 = vsub.s32 0, %v1643
          %v1645 = vrot.slane %v1641, %v1644
          %v1662 = vunpack.c.l.b16 %v1625
          %v1663 = vunpack.c.l.b16 %v1626
          %v1664 = vunpack.c.l.b16 %v1627
          %v1665 = vunpack.c.l.b16 %v1628
          %v1666 = vunpack.c.l.b16 %v1629
          %v1667 = vunpack.c.l.b16 %v1630
          %v1668 = vunpack.c.l.b16 %v1631
          %v1669 = vunpack.c.l.b16 %v1632
          %v1670 = vunpack.c.l.b16 %v1633
          %v1671 = vunpack.c.l.b16 %v1634
          %v1672 = vunpack.c.l.b16 %v1635
          %v1673 = vunpack.c.l.b16 %v1636
          %v1674 = vunpack.c.l.b16 %v1637
          %v1675 = vunpack.c.l.b16 %v1638
          %v1676 = vunpack.c.l.b16 %v1639
          %v1677 = vunpack.c.l.b16 %v1640
          %v1678 = vpack.c.b16 %v1663, %v1662
          %v1679 = vpack.c.b16 %v1665, %v1664
          %v1680 = vpack.c.b16 %v1667, %v1666
          %v1681 = vpack.c.b16 %v1669, %v1668
          %v1682 = vpack.c.b16 %v1671, %v1670
          %v1683 = vpack.c.b16 %v1673, %v1672
          %v1684 = vpack.c.b16 %v1675, %v1674
          %v1685 = vpack.c.b16 %v1677, %v1676
          %1694 = vmatprep.subr.bf16.mxu0 0
          %1695 = vmatpush1.bf16.msra.mxu0 %v1685
          %1696 = vmatprep.subr.bf16.mxu0 0
          %1697 = vmatpush1.bf16.msra.mxu0 %v1684
          %1698 = vmatprep.subr.bf16.mxu0 0
          %1699 = vmatpush1.bf16.msra.mxu0 %v1683
          %1700 = vmatprep.subr.bf16.mxu0 0
          %1701 = vmatpush1.bf16.msra.mxu0 %v1682
          %1702 = vmatprep.subr.bf16.mxu0 0
          %1703 = vmatpush1.bf16.msra.mxu0 %v1681
          %1704 = vmatprep.subr.bf16.mxu0 0
          %1705 = vmatpush1.bf16.msra.mxu0 %v1680
          %1706 = vmatprep.subr.bf16.mxu0 0
          %1707 = vmatpush1.bf16.msra.mxu0 %v1679
          %1708 = vmatprep.subr.bf16.mxu0 0
          %1709 = vmatpush1.bf16.msra.mxu0 %v1678
          %1710 = vmatprep.subr.bf16.mxu0 0
          %1711 = vmatpush2.bf16.msra.mxu0 0
          %1712 = vmatprep.subr.bf16.mxu0 0
          %1713 = vmatpush2.bf16.msra.mxu0 0
          %1714 = vmatprep.subr.bf16.mxu0 0
          %1715 = vmatpush2.bf16.msra.mxu0 0
          %1716 = vmatprep.subr.bf16.mxu0 0
          %1717 = vmatpush2.bf16.msra.mxu0 0
          %1718 = vmatprep.subr.bf16.mxu0 0
          %1719 = vmatpush2.bf16.msra.mxu0 0
          %1720 = vmatprep.subr.bf16.mxu0 0
          %1721 = vmatpush2.bf16.msra.mxu0 0
          %1722 = vmatprep.subr.bf16.mxu0 0
          %1723 = vmatpush2.bf16.msra.mxu0 0
          %1724 = vmatprep.subr.bf16.mxu0 0
          %1725 = vmatpush2.bf16.msra.mxu0 0
          %1726 = vmatprep.mubr.bf16.mxu0 0
          %1727 = vmatmul.mubr.bf16.gmra.mxu0 %v1623
          %v1728 = vpop.f32.mrf.mxu0
          %v1729 = vadd.f32 %v1645, %v1728
          %v1730 = vpop.f32.mrf.mxu0
          %v1731 = vpop.f32.mrf.mxu0
          %v1732 = vadd.f32 %v1645, %v1731
          %v1733 = vpop.f32.mrf.mxu0
          %1734 = vdwg.mxu0
          %v1735 = vadd.f32 %v1491, %v1729
          %v1736 = vadd.f32 %v1492, %v1732
          %v1737 = vld [vmem:[%s368 + $0x8] sm:$0x1]
          %v1738 = vld [vmem:[%s368 + $0x9] sm:$0x1]
          %v1739 = vmul.f32 %v1735, %v386
          %v1740 = vmul.f32 %v1736, %v386
          %1741 = vadd.xlane.f32.xlu0 %v1739
          %v1742 = vpop.xlane.xlu0 %1741
          %1743 = vadd.xlane.f32.xlu0 %v1740
          %v1744 = vpop.xlane.xlu0 %1743
          %v1745 = vmul.f32 %v1742, 0.03125
          %v1746 = vmul.f32 %v1744, 0.03125
          %v1747 = vsub.f32 %v1735, %v1745
          %v1748 = vsub.f32 %v1736, %v1746
          %v1749 = vmul.f32 %v1747, %v386
          %v1750 = vmul.f32 %v1748, %v386
          %v1751 = vmul.f32 %v1749, %v1749
          %v1752 = vmul.f32 %v1750, %v1750
          %1753 = vadd.xlane.f32.xlu0 %v1751
          %v1754 = vpop.xlane.xlu0 %1753
          %1755 = vadd.xlane.f32.xlu0 %v1752
          %v1756 = vpop.xlane.xlu0 %1755
          %v1757 = vmul.f32 %v1754, 0.03125
          %v1758 = vmul.f32 %v1756, 0.03125
          %v1759 = vadd.f32 %v1757, 1e-12
          %v1760 = vadd.f32 %v1758, 1e-12
          %v1761 = vrsqrt.pop %v1759
          %v1762 = vrsqrt.pop %v1760
          %v1763 = vmul.f32 %v1749, %v1761
          %v1764 = vmul.f32 %v1750, %v1762
          %v1765 = vlaneseq
          %v1766 = vshrl.u32 %v1765, 7
          %v1767 = vsub.s32 0, %v1766
          %v1768 = vrot.slane %v1737, %v1767
          %v1769 = vmul.f32 %v1763, %v1768
          %v1770 = vmul.f32 %v1764, %v1768
          %v1771 = vlaneseq
          %v1772 = vshrl.u32 %v1771, 7
          %v1773 = vsub.s32 0, %v1772
          %v1774 = vrot.slane %v1738, %v1773
          %v1775 = vadd.f32 %v1769, %v1774
          %v1776 = vadd.f32 %v1770, %v1774
          %1777 = vst [vmem:[#allocation2] sm:$0xff] %v1775
          %1778 = vst [vmem:[#allocation2 + $0x8] sm:$0xff] %v1776
        $region56: #{distilbert_student_forward.1} parent=43 // pred_fallthru
          _
        %p1779 = scmp.eq.s32.totalorder %s25, 1
        // Predicated region
        $region57: #{distilbert_student_forward.1} parent=43 // pred_check
          %p1780 = pneg %p1779
        $region58: #{distilbert_student_forward.1} parent=43 // pred_check_branch
          %1782 = sbr.rel (%p1780) target = $region60
        $region59: #{distilbert_student_forward.1} parent=43 // pred_region
          %v1783 = vld [vmem:[#allocation2] sm:$0xff]
          %v1784 = vld [vmem:[#allocation2 + $0x8] sm:$0xff]
          %v1785 = vpack.c.bf16 %v1784, %v1783
          %v1786 = vld [vmem:[%s373] sm:$0xf]
          %v1787 = vld [vmem:[%s373 + $0x4] sm:$0xf]
          %v1788 = vld [vmem:[%s373 + $0x8] sm:$0xf]
          %v1789 = vld [vmem:[%s373 + $0xc] sm:$0xf]
          %v1790 = vld [vmem:[%s373 + $0x10] sm:$0xf]
          %v1791 = vld [vmem:[%s373 + $0x14] sm:$0xf]
          %v1792 = vld [vmem:[%s373 + $0x18] sm:$0xf]
          %v1793 = vld [vmem:[%s373 + $0x1c] sm:$0xf]
          %v1794 = vld [vmem:[%s373 + $0x20] sm:$0xf]
          %v1795 = vld [vmem:[%s373 + $0x24] sm:$0xf]
          %v1796 = vld [vmem:[%s373 + $0x28] sm:$0xf]
          %v1797 = vld [vmem:[%s373 + $0x2c] sm:$0xf]
          %v1798 = vld [vmem:[%s373 + $0x30] sm:$0xf]
          %v1799 = vld [vmem:[%s373 + $0x34] sm:$0xf]
          %v1800 = vld [vmem:[%s373 + $0x38] sm:$0xf]
          %v1801 = vld [vmem:[%s373 + $0x3c] sm:$0xf]
          %v1802 = vld [vmem:[%s359 + $0x2] sm:$0x1]
          %v1803 = vlaneseq
          %v1804 = vshrl.u32 %v1803, 7
          %v1805 = vsub.s32 0, %v1804
          %v1806 = vrot.slane %v1802, %v1805
          %v1823 = vunpack.c.l.b16 %v1786
          %v1824 = vunpack.c.l.b16 %v1787
          %v1825 = vunpack.c.l.b16 %v1788
          %v1826 = vunpack.c.l.b16 %v1789
          %v1827 = vunpack.c.l.b16 %v1790
          %v1828 = vunpack.c.l.b16 %v1791
          %v1829 = vunpack.c.l.b16 %v1792
          %v1830 = vunpack.c.l.b16 %v1793
          %v1831 = vunpack.c.l.b16 %v1794
          %v1832 = vunpack.c.l.b16 %v1795
          %v1833 = vunpack.c.l.b16 %v1796
          %v1834 = vunpack.c.l.b16 %v1797
          %v1835 = vunpack.c.l.b16 %v1798
          %v1836 = vunpack.c.l.b16 %v1799
          %v1837 = vunpack.c.l.b16 %v1800
          %v1838 = vunpack.c.l.b16 %v1801
          %v1839 = vpack.c.b16 %v1824, %v1823
          %v1840 = vpack.c.b16 %v1826, %v1825
          %v1841 = vpack.c.b16 %v1828, %v1827
          %v1842 = vpack.c.b16 %v1830, %v1829
          %v1843 = vpack.c.b16 %v1832, %v1831
          %v1844 = vpack.c.b16 %v1834, %v1833
          %v1845 = vpack.c.b16 %v1836, %v1835
          %v1846 = vpack.c.b16 %v1838, %v1837
          %1855 = vmatprep.subr.bf16.mxu0 0
          %1856 = vmatpush1.bf16.msra.mxu0 %v1846
          %1857 = vmatprep.subr.bf16.mxu0 0
          %1858 = vmatpush1.bf16.msra.mxu0 %v1845
          %1859 = vmatprep.subr.bf16.mxu0 0
          %1860 = vmatpush1.bf16.msra.mxu0 %v1844
          %1861 = vmatprep.subr.bf16.mxu0 0
          %1862 = vmatpush1.bf16.msra.mxu0 %v1843
          %1863 = vmatprep.subr.bf16.mxu0 0
          %1864 = vmatpush1.bf16.msra.mxu0 %v1842
          %1865 = vmatprep.subr.bf16.mxu0 0
          %1866 = vmatpush1.bf16.msra.mxu0 %v1841
          %1867 = vmatprep.subr.bf16.mxu0 0
          %1868 = vmatpush1.bf16.msra.mxu0 %v1840
          %1869 = vmatprep.subr.bf16.mxu0 0
          %1870 = vmatpush1.bf16.msra.mxu0 %v1839
          %1871 = vmatprep.subr.bf16.mxu0 0
          %1872 = vmatpush2.bf16.msra.mxu0 0
          %1873 = vmatprep.subr.bf16.mxu0 0
          %1874 = vmatpush2.bf16.msra.mxu0 0
          %1875 = vmatprep.subr.bf16.mxu0 0
          %1876 = vmatpush2.bf16.msra.mxu0 0
          %1877 = vmatprep.subr.bf16.mxu0 0
          %1878 = vmatpush2.bf16.msra.mxu0 0
          %1879 = vmatprep.subr.bf16.mxu0 0
          %1880 = vmatpush2.bf16.msra.mxu0 0
          %1881 = vmatprep.subr.bf16.mxu0 0
          %1882 = vmatpush2.bf16.msra.mxu0 0
          %1883 = vmatprep.subr.bf16.mxu0 0
          %1884 = vmatpush2.bf16.msra.mxu0 0
          %1885 = vmatprep.subr.bf16.mxu0 0
          %1886 = vmatpush2.bf16.msra.mxu0 0
          %1887 = vmatprep.mubr.bf16.mxu0 0
          %1888 = vmatmul.mubr.bf16.gmra.mxu0 %v1785
          %v1889 = vpop.f32.mrf.mxu0
          %v1890 = vadd.f32 %v1806, %v1889
          %v1891 = vpop.f32.mrf.mxu0
          %v1892 = vpop.f32.mrf.mxu0
          %v1893 = vadd.f32 %v1806, %v1892
          %v1894 = vpop.f32.mrf.mxu0
          %1895 = vdwg.mxu0
          %1896 = vst [vmem:[%s378] sm:$0xff] %v1890
          %1897 = vst [vmem:[%s378 + $0x8] sm:$0xff] %v1893
        $region60: #{distilbert_student_forward.1} parent=43 // pred_fallthru
          _
        %p1898 = scmp.lt.s32.totalorder %s24, 1
        %s1899 = scalar_select %p1898, %s24, 1
        %s1900 = smul.addr %s1899, 2
        %s1901 = smul.addr %s1900, 8
        %s1902 = scalar_lea.vmem %s6, %s1901
        // Predicated region
        $region61: #{distilbert_student_forward.1} parent=43 // pred_check
          %p1903 = pneg %p205
        $region62: #{distilbert_student_forward.1} parent=43 // pred_check_branch
          %1905 = sbr.rel (%p1903) target = $region64
        $region63: #{distilbert_student_forward.1} parent=43 // pred_region
          _
        $region64: #{distilbert_student_forward.1} parent=43 // pred_fallthru
          _
      $region44: #{distilbert_student_forward.1} parent=5 // pred_fallthru
        _
      %p1906 = scmp.le.s32.totalorder 2, %s15
      // Predicated region
      $region65: #{distilbert_student_forward.1} parent=5 // pred_check
        %p1907 = pneg %p1906
      $region66: #{distilbert_student_forward.1} parent=5 // pred_check_branch
        %1909 = sbr.rel (%p1907) target = $region68
      $region67: #{distilbert_student_forward.1} parent=5 // pred_region
        %s1910 = ssub.s32 %s15, 2
        // Predicated region
        $region69: #{distilbert_student_forward.1} parent=67 // pred_check
          %p1911 = pneg %p211
        $region70: #{distilbert_student_forward.1} parent=67 // pred_check_branch
          %1913 = sbr.rel (%p1911) target = $region72
        $region71: #{distilbert_student_forward.1} parent=67 // pred_region
          %p1914 = scmp.lt.s32.totalorder %s26, 1
          %s1915 = scalar_select %p1914, %s26, 1
          %s1916 = smul.addr %s1915, 2
          %s1917 = smul.addr %s1916, 8
          %s1918 = scalar_lea.vmem %s6, %s1917
        $region72: #{distilbert_student_forward.1} parent=67 // pred_fallthru
          _
      $region68: #{distilbert_student_forward.1} parent=5 // pred_fallthru
        _
    $region6: #{distilbert_student_forward.1} parent=1 // loop_footer
      %s19 = sadd.s32 1, %s15
    $region7: #{distilbert_student_forward.1} parent=1 // loop_footer_branch
      %14 = sbr.rel target = $region3
    $region8: #{distilbert_student_forward.1} parent=1 // loop_exit
      _
    %1919 = vsyncpa [#allocation4], 1
    %s1920 = scalar_lea.sflag [#allocation4], 1
    %1921 = vsyncpa %s1920, 1

</llo_original>
